<compile_context>
chip_gen: v6e
topology: v6e:2x2x1
jax: 0.10.0
libtpu: 0.0.40
codegen_flags: <defaults>
</compile_context>

<pallas_src>
import functools
from math import sqrt

import jax
import jax.numpy as jnp
from jax import lax
from jax.experimental import pallas as pl
from jax.experimental.pallas import tpu as pltpu

LANE = 128


def _cdiv(a, b):
    return -(-a // b)


def _round_up(a, m):
    return _cdiv(a, m) * m


def mhsa_kernel(x_ref, w_ref, o_ref, *, num_heads, dk, dv, dkp, dvp, b_blk, n):
    rows = b_blk * n
    dim_in = x_ref.shape[-1]

    # Cast to bf16 in-kernel (VPU) so the MXU sees bf16 operands while the
    # HBM->VMEM DMA carries the caller's x exactly once (no wrapper-side
    # pad/copy/cast pass over the input).
    x2d = x_ref[...].reshape(rows, dim_in).astype(jnp.bfloat16)

    # One fused QKV projection against the section-padded weight
    # [ Wq*norm | 0 | Wk | 0 | Wv | 0 ]; f32 accumulation on the MXU.
    qkv = jnp.dot(x2d, w_ref[...], preferred_element_type=jnp.float32)

    # 128-lane-aligned section slices (pad lanes of each section are zero).
    q = qkv[:, 0:dkp].reshape(b_blk, n, dkp).astype(jnp.bfloat16)
    k = qkv[:, dkp:2 * dkp].reshape(b_blk, n, dkp).astype(jnp.bfloat16)
    v = qkv[:, 2 * dkp:2 * dkp + dvp].reshape(b_blk, n, dvp).astype(jnp.bfloat16)

    # Per-head lane masks derived from hoisted iotas (no unaligned extracts).
    lane_k = lax.broadcasted_iota(jnp.int32, (1, 1, dkp), 2)
    lane_v = lax.broadcasted_iota(jnp.int32, (1, 1, dvp), 2)

    acc = jnp.zeros((b_blk, n, dvp), jnp.float32)
    for h in range(num_heads):                       # static unroll (8 heads)
        kmask = (lane_k >= h * dk) & (lane_k < (h + 1) * dk)
        vmask = (lane_v >= h * dv) & (lane_v < (h + 1) * dv)

        # Restrict the 128-lane contraction to head h's lanes by zero-masking
        # K; pad / other-head lanes contribute nothing, and the MXU pass costs
        # the same over 128 lanes as over 10.
        kh = jnp.where(kmask, k, 0)
        s = jnp.einsum("bqd,bkd->bqk", q, kh,
                       preferred_element_type=jnp.float32)   # (b_blk, n, n)

        s = s - jnp.max(s, axis=-1, keepdims=True)
        p = jnp.exp(s)
        inv = pl.reciprocal(jnp.sum(p, axis=-1, keepdims=True), approx=True)
        p = (p * inv).astype(jnp.bfloat16)

        # Attend over the full packed V section, then mask to head h's output
        # lanes and accumulate -> the accumulator is already in the packed
        # (head-merged) layout; no per-head partial stores.
        oh = jnp.einsum("bqk,bkd->bqd", p, v,
                        preferred_element_type=jnp.float32)  # (b_blk, n, dvp)
        acc = acc + jnp.where(vmask, oh, 0.0)

    # ONE full-width, lane-dense (128-lane) store of the output block.
    o_ref[...] = acc.astype(o_ref.dtype)

    # TODO(synk): layer_norm + fc1..fc4 + batchnorm + dropout of the PyTorch
    # forward are intentionally not implemented — they do not affect `result`.


def fuse_qkv_weights(wq, wk, wv, *, num_heads):
    """Fused, section-padded, bf16 QKV weight with norm_fact folded into Q."""
    dim_in, dim_k = wq.shape
    dim_v = wv.shape[1]
    dk = dim_k // num_heads
    norm_fact = 1.0 / sqrt(dk)
    dkp = _round_up(dim_k, LANE)    # 80  -> 128
    dvp = _round_up(dim_v, LANE)    # 80  -> 128

    w = jnp.zeros((dim_in, 2 * dkp + dvp), jnp.float32)
    w = w.at[:, 0:dim_k].set(wq * norm_fact)
    w = w.at[:, dkp:dkp + dim_k].set(wk)
    w = w.at[:, 2 * dkp:2 * dkp + dim_v].set(wv)
    return w.astype(jnp.bfloat16)


def make_mhsa(wq, wk, wv, *, num_heads):
    """Builds a jitted attention fn; the fused weight is constructed once here."""
    dim_in, dim_k = wq.shape
    dim_v = wv.shape[1]
    dk = dim_k // num_heads
    dv = dim_v // num_heads
    dkp = _round_up(dim_k, LANE)
    dvp = _round_up(dim_v, LANE)
    w_fused = fuse_qkv_weights(wq, wk, wv, num_heads=num_heads)

    @jax.jit
    def apply(x):
        batch, n, d_in = x.shape
        assert d_in == dim_in

        # Fold batch rows into each grid step (targets ~256 projection rows),
        # but keep >= 2 grid steps whenever batch >= 2 so the "parallel" batch
        # axis actually shards across both TensorCores on dual-TC chips (v7x).
        rows_target = 256
        b_blk = max(1, min(batch, rows_target // max(n, 1)))
        if batch >= 2 and _cdiv(batch, b_blk) < 2:
            b_blk = _cdiv(batch, 2)
        num_blocks = _cdiv(batch, b_blk)
        batch_pad = num_blocks * b_blk

        x_in = x
        if batch_pad != batch:   # only pads in the ragged-batch case
            x_in = jnp.pad(x, ((0, batch_pad - batch), (0, 0), (0, 0)))

        kernel = functools.partial(
            mhsa_kernel, num_heads=num_heads, dk=dk, dv=dv,
            dkp=dkp, dvp=dvp, b_blk=b_blk, n=n)

        flops = (2 * batch_pad * n * dim_in * (2 * dkp + dvp)
                 + num_heads * 2 * batch_pad * n * n * (dkp + dvp))
        bytes_accessed = (x_in.size * x_in.dtype.itemsize
                          + w_fused.size * w_fused.dtype.itemsize
                          + batch_pad * n * dvp * 4)

        out = pl.pallas_call(
            kernel,
            out_shape=jax.ShapeDtypeStruct((batch_pad, n, dvp), jnp.float32),
            grid_spec=pltpu.PrefetchScalarGridSpec(
                num_scalar_prefetch=0,
                grid=(num_blocks,),
                in_specs=[
                    # Full-extent last dim (283): no wrapper-side input padding.
                    pl.BlockSpec((b_blk, n, dim_in), lambda b: (b, 0, 0)),
                    pl.BlockSpec((dim_in, 2 * dkp + dvp), lambda b: (0, 0)),
                ],
                out_specs=pl.BlockSpec((b_blk, n, dvp), lambda b: (b, 0, 0)),
            ),
            # Batch-block axis is embarrassingly parallel (megacore / dual-TC).
            # VMEM use is tiny (<1 MiB double-buffered) on every generation.
            compiler_params=pltpu.CompilerParams(
                dimension_semantics=("parallel",)),
            cost_estimate=pl.CostEstimate(
                flops=flops,
                transcendentals=num_heads * batch_pad * n * n,
                bytes_accessed=bytes_accessed),
        )(x_in, w_fused)

        # Strip batch padding (if any) and the output lane padding (128 -> 80).
        return out[:batch, :, :dim_v]

    return apply


def mhsa_reference(x, wq, wk, wv, *, num_heads):
    """Pure-JAX f32 reference mirroring the PyTorch forward (returned value)."""
    batch, n, _ = x.shape
    dim_k = wq.shape[1]
    dim_v = wv.shape[1]
    dk = dim_k // num_heads
    dv = dim_v // num_heads
    norm_fact = 1.0 / sqrt(dk)

    q = (x @ wq).reshape(batch, n, num_heads, dk).transpose(0, 2, 1, 3)
    k = (x @ wk).reshape(batch, n, num_heads, dk).transpose(0, 2, 1, 3)
    v = (x @ wv).reshape(batch, n, num_heads, dv).transpose(0, 2, 1, 3)
    dist = jnp.einsum("bhqd,bhkd->bhqk", q, k) * norm_fact
    dist = jax.nn.softmax(dist, axis=-1)
    att = jnp.einsum("bhqk,bhkd->bhqd", dist, v)
    return att.transpose(0, 2, 1, 3).reshape(batch, n, dim_v)


if __name__ == "__main__":
    dim_in, dim_k, dim_v = 283, 80, 80
    # The module's default num_heads=6 violates its own assert (80 % 6 != 0);
    # use num_heads=8 (dk = dv = 10), which satisfies it.
    num_heads = 8
    batch, length = 2, 8

    key = jax.random.PRNGKey(0)
    kx, kq, kk, kv = jax.random.split(key, 4)

    x = jax.random.normal(kx, (batch, length, dim_in), dtype=jnp.float32)
    # nn.Linear-style U(-1/sqrt(fan_in), 1/sqrt(fan_in)) init, stored
    # transposed as (dim_in, dim_k) for the x @ W convention (no bias).
    bound = 1.0 / sqrt(dim_in)
    wq = jax.random.uniform(kq, (dim_in, dim_k), jnp.float32, -bound, bound)
    wk = jax.random.uniform(kk, (dim_in, dim_k), jnp.float32, -bound, bound)
    wv = jax.random.uniform(kv, (dim_in, dim_v), jnp.float32, -bound, bound)

    mhsa = make_mhsa(wq, wk, wv, num_heads=num_heads)
    out = jax.block_until_ready(mhsa(x))

    ref = mhsa_reference(x, wq, wk, wv, num_heads=num_heads)
    assert out.shape == (batch, length, dim_v)
    # bf16 MXU operands (283-deep contraction) + EUP approximate reciprocal in
    # the softmax denominator -> compare against the f32 reference at
    # bf16-level tolerance (per perf review).
    assert jnp.allclose(out, ref, atol=2e-2, rtol=2e-2), (
        "Pallas kernel mismatch vs reference: max abs err = "
        f"{float(jnp.max(jnp.abs(out - ref)))}")
    print("KERNEL_OK")
</pallas_src>

<mosaic_0001>
module attributes {stable_mosaic.version = 11 : i64} {
  func.func @mhsa_kernel(%arg0: i32, %arg1: memref<1x8x283xf32, #tpu.memory_space<vmem>>, %arg2: memref<283x384xbf16, #tpu.memory_space<vmem>>, %arg3: memref<1x8x128xf32, #tpu.memory_space<vmem>>) attributes {dimension_semantics = [#tpu.dimension_semantics<parallel>], iteration_bounds = array<i64: 2>, scalar_prefetch = 0 : i64, scratch_operands = 0 : i64, tpu.core_type = #tpu.core_type<tc>, window_params = [{transform_indices = @transform_0, window_bounds = array<i64: 1, 8, 283>}, {pipeline_mode = #tpu.pipeline_mode<synchronous>, transform_indices = @transform_1, window_bounds = array<i64: 283, 384>}, {transform_indices = @transform_2, window_bounds = array<i64: 1, 8, 128>}]} {
    %c0 = arith.constant 0 : index
    %c0_0 = arith.constant 0 : index
    %c0_1 = arith.constant 0 : index
    %0 = vector.load %arg1[%c0, %c0_0, %c0_1] : memref<1x8x283xf32, #tpu.memory_space<vmem>>, vector<1x8x283xf32>
    %1 = vector.shape_cast %0 : vector<1x8x283xf32> to vector<8x283xf32>
    %2 = arith.truncf %1 : vector<8x283xf32> to vector<8x283xbf16>
    %c0_2 = arith.constant 0 : index
    %c0_3 = arith.constant 0 : index
    %3 = vector.load %arg2[%c0_2, %c0_3] : memref<283x384xbf16, #tpu.memory_space<vmem>>, vector<283x384xbf16>
    %cst = arith.constant dense<0.000000e+00> : vector<8x384xf32>
    %4 = tpu.matmul %2, %3, %cst {dimension_numbers = #tpu.dot_dimension_numbers<[1], [0], [0], [1], [0, 0, 1, 1], [], []>} : vector<8x283xbf16>, vector<283x384xbf16>, vector<8x384xf32> -> vector<8x384xf32>
    %5 = vector.extract_strided_slice %4 {offsets = [0, 0], sizes = [8, 128], strides = [1, 1]} : vector<8x384xf32> to vector<8x128xf32>
    %6 = vector.shape_cast %5 : vector<8x128xf32> to vector<1x8x128xf32>
    %7 = arith.truncf %6 : vector<1x8x128xf32> to vector<1x8x128xbf16>
    %8 = vector.extract_strided_slice %4 {offsets = [0, 128], sizes = [8, 128], strides = [1, 1]} : vector<8x384xf32> to vector<8x128xf32>
    %9 = vector.shape_cast %8 : vector<8x128xf32> to vector<1x8x128xf32>
    %10 = arith.truncf %9 : vector<1x8x128xf32> to vector<1x8x128xbf16>
    %11 = vector.extract_strided_slice %4 {offsets = [0, 256], sizes = [8, 128], strides = [1, 1]} : vector<8x384xf32> to vector<8x128xf32>
    %12 = vector.shape_cast %11 : vector<8x128xf32> to vector<1x8x128xf32>
    %13 = arith.truncf %12 : vector<1x8x128xf32> to vector<1x8x128xbf16>
    %14 = tpu.iota {dimensions = array<i32: 2>} : vector<1x1x128xi32>
    %15 = tpu.iota {dimensions = array<i32: 2>} : vector<1x1x128xi32>
    %cst_4 = arith.constant 0.000000e+00 : f32
    %16 = vector.broadcast %cst_4 : f32 to vector<1x8x128xf32>
    %c0_i32 = arith.constant 0 : i32
    %17 = vector.broadcast %c0_i32 : i32 to vector<1x1x128xi32>
    %18 = arith.cmpi sge, %14, %17 : vector<1x1x128xi32>
    %c10_i32 = arith.constant 10 : i32
    %19 = vector.broadcast %c10_i32 : i32 to vector<1x1x128xi32>
    %20 = arith.cmpi slt, %14, %19 : vector<1x1x128xi32>
    %21 = arith.andi %18, %20 : vector<1x1x128xi1>
    %c0_i32_5 = arith.constant 0 : i32
    %22 = vector.broadcast %c0_i32_5 : i32 to vector<1x1x128xi32>
    %23 = arith.cmpi sge, %15, %22 : vector<1x1x128xi32>
    %c10_i32_6 = arith.constant 10 : i32
    %24 = vector.broadcast %c10_i32_6 : i32 to vector<1x1x128xi32>
    %25 = arith.cmpi slt, %15, %24 : vector<1x1x128xi32>
    %26 = arith.andi %23, %25 : vector<1x1x128xi1>
    %c0_i32_7 = arith.constant 0 : i32
    %27 = arith.sitofp %c0_i32_7 : i32 to bf16
    %28 = vector.shape_cast %21 : vector<1x1x128xi1> to vector<1x1x128xi1>
    %29 = vector.broadcast %28 : vector<1x1x128xi1> to vector<1x8x128xi1>
    %30 = vector.broadcast %27 : bf16 to vector<1x8x128xbf16>
    %31 = arith.select %29, %10, %30 : vector<1x8x128xi1>, vector<1x8x128xbf16>
    "tpu.trace_start"() <{level = 10 : i32, message = "bqd,bkd->bqk"}> : () -> ()
    %cst_8 = arith.constant dense<0.000000e+00> : vector<1x8x8xf32>
    %32 = tpu.matmul %7, %31, %cst_8 {dimension_numbers = #tpu.dot_dimension_numbers<[2], [2], [1], [1], [0, 0, 0, 1, 1, 1], [0], [0]>} : vector<1x8x128xbf16>, vector<1x8x128xbf16>, vector<1x8x8xf32> -> vector<1x8x8xf32>
    "tpu.trace_stop"() : () -> ()
    %cst_9 = arith.constant dense<0xFF800000> : vector<1x8xf32>
    %33 = vector.multi_reduction <maximumf>, %32, %cst_9 [2] : vector<1x8x8xf32> to vector<1x8xf32>
    %34 = vector.shape_cast %33 : vector<1x8xf32> to vector<1x8x1xf32>
    %35 = vector.broadcast %34 : vector<1x8x1xf32> to vector<1x8x8xf32>
    %36 = arith.subf %32, %35 : vector<1x8x8xf32>
    %37 = math.exp %36 : vector<1x8x8xf32>
    %cst_10 = arith.constant dense<0.000000e+00> : vector<1x8xf32>
    %38 = vector.multi_reduction <add>, %37, %cst_10 [2] : vector<1x8x8xf32> to vector<1x8xf32>
    %39 = vector.shape_cast %38 : vector<1x8xf32> to vector<1x8x1xf32>
    %40 = tpu.reciprocal %39 {approx = true} : vector<1x8x1xf32> -> vector<1x8x1xf32>
    %41 = vector.broadcast %40 : vector<1x8x1xf32> to vector<1x8x8xf32>
    %42 = arith.mulf %37, %41 : vector<1x8x8xf32>
    %43 = arith.truncf %42 : vector<1x8x8xf32> to vector<1x8x8xbf16>
    "tpu.trace_start"() <{level = 10 : i32, message = "bqk,bkd->bqd"}> : () -> ()
    %cst_11 = arith.constant dense<0.000000e+00> : vector<1x8x128xf32>
    %44 = tpu.matmul %43, %13, %cst_11 {dimension_numbers = #tpu.dot_dimension_numbers<[2], [1], [1], [2], [0, 0, 0, 1, 1, 2], [0], [0]>} : vector<1x8x8xbf16>, vector<1x8x128xbf16>, vector<1x8x128xf32> -> vector<1x8x128xf32>
    %cst_12 = arith.constant 0.000000e+00 : f32
    "tpu.trace_stop"() : () -> ()
    %45 = vector.shape_cast %26 : vector<1x1x128xi1> to vector<1x1x128xi1>
    %46 = vector.broadcast %45 : vector<1x1x128xi1> to vector<1x8x128xi1>
    %47 = vector.broadcast %cst_12 : f32 to vector<1x8x128xf32>
    %48 = arith.select %46, %44, %47 : vector<1x8x128xi1>, vector<1x8x128xf32>
    %49 = arith.addf %16, %48 : vector<1x8x128xf32>
    %c10_i32_13 = arith.constant 10 : i32
    %50 = vector.broadcast %c10_i32_13 : i32 to vector<1x1x128xi32>
    %51 = arith.cmpi sge, %14, %50 : vector<1x1x128xi32>
    %c20_i32 = arith.constant 20 : i32
    %52 = vector.broadcast %c20_i32 : i32 to vector<1x1x128xi32>
    %53 = arith.cmpi slt, %14, %52 : vector<1x1x128xi32>
    %54 = arith.andi %51, %53 : vector<1x1x128xi1>
    %c10_i32_14 = arith.constant 10 : i32
    %55 = vector.broadcast %c10_i32_14 : i32 to vector<1x1x128xi32>
    %56 = arith.cmpi sge, %15, %55 : vector<1x1x128xi32>
    %c20_i32_15 = arith.constant 20 : i32
    %57 = vector.broadcast %c20_i32_15 : i32 to vector<1x1x128xi32>
    %58 = arith.cmpi slt, %15, %57 : vector<1x1x128xi32>
    %59 = arith.andi %56, %58 : vector<1x1x128xi1>
    %c0_i32_16 = arith.constant 0 : i32
    %60 = arith.sitofp %c0_i32_16 : i32 to bf16
    %61 = vector.shape_cast %54 : vector<1x1x128xi1> to vector<1x1x128xi1>
    %62 = vector.broadcast %61 : vector<1x1x128xi1> to vector<1x8x128xi1>
    %63 = vector.broadcast %60 : bf16 to vector<1x8x128xbf16>
    %64 = arith.select %62, %10, %63 : vector<1x8x128xi1>, vector<1x8x128xbf16>
    "tpu.trace_start"() <{level = 10 : i32, message = "bqd,bkd->bqk"}> : () -> ()
    %cst_17 = arith.constant dense<0.000000e+00> : vector<1x8x8xf32>
    %65 = tpu.matmul %7, %64, %cst_17 {dimension_numbers = #tpu.dot_dimension_numbers<[2], [2], [1], [1], [0, 0, 0, 1, 1, 1], [0], [0]>} : vector<1x8x128xbf16>, vector<1x8x128xbf16>, vector<1x8x8xf32> -> vector<1x8x8xf32>
    "tpu.trace_stop"() : () -> ()
    %cst_18 = arith.constant dense<0xFF800000> : vector<1x8xf32>
    %66 = vector.multi_reduction <maximumf>, %65, %cst_18 [2] : vector<1x8x8xf32> to vector<1x8xf32>
    %67 = vector.shape_cast %66 : vector<1x8xf32> to vector<1x8x1xf32>
    %68 = vector.broadcast %67 : vector<1x8x1xf32> to vector<1x8x8xf32>
    %69 = arith.subf %65, %68 : vector<1x8x8xf32>
    %70 = math.exp %69 : vector<1x8x8xf32>
    %cst_19 = arith.constant dense<0.000000e+00> : vector<1x8xf32>
    %71 = vector.multi_reduction <add>, %70, %cst_19 [2] : vector<1x8x8xf32> to vector<1x8xf32>
    %72 = vector.shape_cast %71 : vector<1x8xf32> to vector<1x8x1xf32>
    %73 = tpu.reciprocal %72 {approx = true} : vector<1x8x1xf32> -> vector<1x8x1xf32>
    %74 = vector.broadcast %73 : vector<1x8x1xf32> to vector<1x8x8xf32>
    %75 = arith.mulf %70, %74 : vector<1x8x8xf32>
    %76 = arith.truncf %75 : vector<1x8x8xf32> to vector<1x8x8xbf16>
    "tpu.trace_start"() <{level = 10 : i32, message = "bqk,bkd->bqd"}> : () -> ()
    %cst_20 = arith.constant dense<0.000000e+00> : vector<1x8x128xf32>
    %77 = tpu.matmul %76, %13, %cst_20 {dimension_numbers = #tpu.dot_dimension_numbers<[2], [1], [1], [2], [0, 0, 0, 1, 1, 2], [0], [0]>} : vector<1x8x8xbf16>, vector<1x8x128xbf16>, vector<1x8x128xf32> -> vector<1x8x128xf32>
    %cst_21 = arith.constant 0.000000e+00 : f32
    "tpu.trace_stop"() : () -> ()
    %78 = vector.shape_cast %59 : vector<1x1x128xi1> to vector<1x1x128xi1>
    %79 = vector.broadcast %78 : vector<1x1x128xi1> to vector<1x8x128xi1>
    %80 = vector.broadcast %cst_21 : f32 to vector<1x8x128xf32>
    %81 = arith.select %79, %77, %80 : vector<1x8x128xi1>, vector<1x8x128xf32>
    %82 = arith.addf %49, %81 : vector<1x8x128xf32>
    %c20_i32_22 = arith.constant 20 : i32
    %83 = vector.broadcast %c20_i32_22 : i32 to vector<1x1x128xi32>
    %84 = arith.cmpi sge, %14, %83 : vector<1x1x128xi32>
    %c30_i32 = arith.constant 30 : i32
    %85 = vector.broadcast %c30_i32 : i32 to vector<1x1x128xi32>
    %86 = arith.cmpi slt, %14, %85 : vector<1x1x128xi32>
    %87 = arith.andi %84, %86 : vector<1x1x128xi1>
    %c20_i32_23 = arith.constant 20 : i32
    %88 = vector.broadcast %c20_i32_23 : i32 to vector<1x1x128xi32>
    %89 = arith.cmpi sge, %15, %88 : vector<1x1x128xi32>
    %c30_i32_24 = arith.constant 30 : i32
    %90 = vector.broadcast %c30_i32_24 : i32 to vector<1x1x128xi32>
    %91 = arith.cmpi slt, %15, %90 : vector<1x1x128xi32>
    %92 = arith.andi %89, %91 : vector<1x1x128xi1>
    %c0_i32_25 = arith.constant 0 : i32
    %93 = arith.sitofp %c0_i32_25 : i32 to bf16
    %94 = vector.shape_cast %87 : vector<1x1x128xi1> to vector<1x1x128xi1>
    %95 = vector.broadcast %94 : vector<1x1x128xi1> to vector<1x8x128xi1>
    %96 = vector.broadcast %93 : bf16 to vector<1x8x128xbf16>
    %97 = arith.select %95, %10, %96 : vector<1x8x128xi1>, vector<1x8x128xbf16>
    "tpu.trace_start"() <{level = 10 : i32, message = "bqd,bkd->bqk"}> : () -> ()
    %cst_26 = arith.constant dense<0.000000e+00> : vector<1x8x8xf32>
    %98 = tpu.matmul %7, %97, %cst_26 {dimension_numbers = #tpu.dot_dimension_numbers<[2], [2], [1], [1], [0, 0, 0, 1, 1, 1], [0], [0]>} : vector<1x8x128xbf16>, vector<1x8x128xbf16>, vector<1x8x8xf32> -> vector<1x8x8xf32>
    "tpu.trace_stop"() : () -> ()
    %cst_27 = arith.constant dense<0xFF800000> : vector<1x8xf32>
    %99 = vector.multi_reduction <maximumf>, %98, %cst_27 [2] : vector<1x8x8xf32> to vector<1x8xf32>
    %100 = vector.shape_cast %99 : vector<1x8xf32> to vector<1x8x1xf32>
    %101 = vector.broadcast %100 : vector<1x8x1xf32> to vector<1x8x8xf32>
    %102 = arith.subf %98, %101 : vector<1x8x8xf32>
    %103 = math.exp %102 : vector<1x8x8xf32>
    %cst_28 = arith.constant dense<0.000000e+00> : vector<1x8xf32>
    %104 = vector.multi_reduction <add>, %103, %cst_28 [2] : vector<1x8x8xf32> to vector<1x8xf32>
    %105 = vector.shape_cast %104 : vector<1x8xf32> to vector<1x8x1xf32>
    %106 = tpu.reciprocal %105 {approx = true} : vector<1x8x1xf32> -> vector<1x8x1xf32>
    %107 = vector.broadcast %106 : vector<1x8x1xf32> to vector<1x8x8xf32>
    %108 = arith.mulf %103, %107 : vector<1x8x8xf32>
    %109 = arith.truncf %108 : vector<1x8x8xf32> to vector<1x8x8xbf16>
    "tpu.trace_start"() <{level = 10 : i32, message = "bqk,bkd->bqd"}> : () -> ()
    %cst_29 = arith.constant dense<0.000000e+00> : vector<1x8x128xf32>
    %110 = tpu.matmul %109, %13, %cst_29 {dimension_numbers = #tpu.dot_dimension_numbers<[2], [1], [1], [2], [0, 0, 0, 1, 1, 2], [0], [0]>} : vector<1x8x8xbf16>, vector<1x8x128xbf16>, vector<1x8x128xf32> -> vector<1x8x128xf32>
    %cst_30 = arith.constant 0.000000e+00 : f32
    "tpu.trace_stop"() : () -> ()
    %111 = vector.shape_cast %92 : vector<1x1x128xi1> to vector<1x1x128xi1>
    %112 = vector.broadcast %111 : vector<1x1x128xi1> to vector<1x8x128xi1>
    %113 = vector.broadcast %cst_30 : f32 to vector<1x8x128xf32>
    %114 = arith.select %112, %110, %113 : vector<1x8x128xi1>, vector<1x8x128xf32>
    %115 = arith.addf %82, %114 : vector<1x8x128xf32>
    %c30_i32_31 = arith.constant 30 : i32
    %116 = vector.broadcast %c30_i32_31 : i32 to vector<1x1x128xi32>
    %117 = arith.cmpi sge, %14, %116 : vector<1x1x128xi32>
    %c40_i32 = arith.constant 40 : i32
    %118 = vector.broadcast %c40_i32 : i32 to vector<1x1x128xi32>
    %119 = arith.cmpi slt, %14, %118 : vector<1x1x128xi32>
    %120 = arith.andi %117, %119 : vector<1x1x128xi1>
    %c30_i32_32 = arith.constant 30 : i32
    %121 = vector.broadcast %c30_i32_32 : i32 to vector<1x1x128xi32>
    %122 = arith.cmpi sge, %15, %121 : vector<1x1x128xi32>
    %c40_i32_33 = arith.constant 40 : i32
    %123 = vector.broadcast %c40_i32_33 : i32 to vector<1x1x128xi32>
    %124 = arith.cmpi slt, %15, %123 : vector<1x1x128xi32>
    %125 = arith.andi %122, %124 : vector<1x1x128xi1>
    %c0_i32_34 = arith.constant 0 : i32
    %126 = arith.sitofp %c0_i32_34 : i32 to bf16
    %127 = vector.shape_cast %120 : vector<1x1x128xi1> to vector<1x1x128xi1>
    %128 = vector.broadcast %127 : vector<1x1x128xi1> to vector<1x8x128xi1>
    %129 = vector.broadcast %126 : bf16 to vector<1x8x128xbf16>
    %130 = arith.select %128, %10, %129 : vector<1x8x128xi1>, vector<1x8x128xbf16>
    "tpu.trace_start"() <{level = 10 : i32, message = "bqd,bkd->bqk"}> : () -> ()
    %cst_35 = arith.constant dense<0.000000e+00> : vector<1x8x8xf32>
    %131 = tpu.matmul %7, %130, %cst_35 {dimension_numbers = #tpu.dot_dimension_numbers<[2], [2], [1], [1], [0, 0, 0, 1, 1, 1], [0], [0]>} : vector<1x8x128xbf16>, vector<1x8x128xbf16>, vector<1x8x8xf32> -> vector<1x8x8xf32>
    "tpu.trace_stop"() : () -> ()
    %cst_36 = arith.constant dense<0xFF800000> : vector<1x8xf32>
    %132 = vector.multi_reduction <maximumf>, %131, %cst_36 [2] : vector<1x8x8xf32> to vector<1x8xf32>
    %133 = vector.shape_cast %132 : vector<1x8xf32> to vector<1x8x1xf32>
    %134 = vector.broadcast %133 : vector<1x8x1xf32> to vector<1x8x8xf32>
    %135 = arith.subf %131, %134 : vector<1x8x8xf32>
    %136 = math.exp %135 : vector<1x8x8xf32>
    %cst_37 = arith.constant dense<0.000000e+00> : vector<1x8xf32>
    %137 = vector.multi_reduction <add>, %136, %cst_37 [2] : vector<1x8x8xf32> to vector<1x8xf32>
    %138 = vector.shape_cast %137 : vector<1x8xf32> to vector<1x8x1xf32>
    %139 = tpu.reciprocal %138 {approx = true} : vector<1x8x1xf32> -> vector<1x8x1xf32>
    %140 = vector.broadcast %139 : vector<1x8x1xf32> to vector<1x8x8xf32>
    %141 = arith.mulf %136, %140 : vector<1x8x8xf32>
    %142 = arith.truncf %141 : vector<1x8x8xf32> to vector<1x8x8xbf16>
    "tpu.trace_start"() <{level = 10 : i32, message = "bqk,bkd->bqd"}> : () -> ()
    %cst_38 = arith.constant dense<0.000000e+00> : vector<1x8x128xf32>
    %143 = tpu.matmul %142, %13, %cst_38 {dimension_numbers = #tpu.dot_dimension_numbers<[2], [1], [1], [2], [0, 0, 0, 1, 1, 2], [0], [0]>} : vector<1x8x8xbf16>, vector<1x8x128xbf16>, vector<1x8x128xf32> -> vector<1x8x128xf32>
    %cst_39 = arith.constant 0.000000e+00 : f32
    "tpu.trace_stop"() : () -> ()
    %144 = vector.shape_cast %125 : vector<1x1x128xi1> to vector<1x1x128xi1>
    %145 = vector.broadcast %144 : vector<1x1x128xi1> to vector<1x8x128xi1>
    %146 = vector.broadcast %cst_39 : f32 to vector<1x8x128xf32>
    %147 = arith.select %145, %143, %146 : vector<1x8x128xi1>, vector<1x8x128xf32>
    %148 = arith.addf %115, %147 : vector<1x8x128xf32>
    %c40_i32_40 = arith.constant 40 : i32
    %149 = vector.broadcast %c40_i32_40 : i32 to vector<1x1x128xi32>
    %150 = arith.cmpi sge, %14, %149 : vector<1x1x128xi32>
    %c50_i32 = arith.constant 50 : i32
    %151 = vector.broadcast %c50_i32 : i32 to vector<1x1x128xi32>
    %152 = arith.cmpi slt, %14, %151 : vector<1x1x128xi32>
    %153 = arith.andi %150, %152 : vector<1x1x128xi1>
    %c40_i32_41 = arith.constant 40 : i32
    %154 = vector.broadcast %c40_i32_41 : i32 to vector<1x1x128xi32>
    %155 = arith.cmpi sge, %15, %154 : vector<1x1x128xi32>
    %c50_i32_42 = arith.constant 50 : i32
    %156 = vector.broadcast %c50_i32_42 : i32 to vector<1x1x128xi32>
    %157 = arith.cmpi slt, %15, %156 : vector<1x1x128xi32>
    %158 = arith.andi %155, %157 : vector<1x1x128xi1>
    %c0_i32_43 = arith.constant 0 : i32
    %159 = arith.sitofp %c0_i32_43 : i32 to bf16
    %160 = vector.shape_cast %153 : vector<1x1x128xi1> to vector<1x1x128xi1>
    %161 = vector.broadcast %160 : vector<1x1x128xi1> to vector<1x8x128xi1>
    %162 = vector.broadcast %159 : bf16 to vector<1x8x128xbf16>
    %163 = arith.select %161, %10, %162 : vector<1x8x128xi1>, vector<1x8x128xbf16>
    "tpu.trace_start"() <{level = 10 : i32, message = "bqd,bkd->bqk"}> : () -> ()
    %cst_44 = arith.constant dense<0.000000e+00> : vector<1x8x8xf32>
    %164 = tpu.matmul %7, %163, %cst_44 {dimension_numbers = #tpu.dot_dimension_numbers<[2], [2], [1], [1], [0, 0, 0, 1, 1, 1], [0], [0]>} : vector<1x8x128xbf16>, vector<1x8x128xbf16>, vector<1x8x8xf32> -> vector<1x8x8xf32>
    "tpu.trace_stop"() : () -> ()
    %cst_45 = arith.constant dense<0xFF800000> : vector<1x8xf32>
    %165 = vector.multi_reduction <maximumf>, %164, %cst_45 [2] : vector<1x8x8xf32> to vector<1x8xf32>
    %166 = vector.shape_cast %165 : vector<1x8xf32> to vector<1x8x1xf32>
    %167 = vector.broadcast %166 : vector<1x8x1xf32> to vector<1x8x8xf32>
    %168 = arith.subf %164, %167 : vector<1x8x8xf32>
    %169 = math.exp %168 : vector<1x8x8xf32>
    %cst_46 = arith.constant dense<0.000000e+00> : vector<1x8xf32>
    %170 = vector.multi_reduction <add>, %169, %cst_46 [2] : vector<1x8x8xf32> to vector<1x8xf32>
    %171 = vector.shape_cast %170 : vector<1x8xf32> to vector<1x8x1xf32>
    %172 = tpu.reciprocal %171 {approx = true} : vector<1x8x1xf32> -> vector<1x8x1xf32>
    %173 = vector.broadcast %172 : vector<1x8x1xf32> to vector<1x8x8xf32>
    %174 = arith.mulf %169, %173 : vector<1x8x8xf32>
    %175 = arith.truncf %174 : vector<1x8x8xf32> to vector<1x8x8xbf16>
    "tpu.trace_start"() <{level = 10 : i32, message = "bqk,bkd->bqd"}> : () -> ()
    %cst_47 = arith.constant dense<0.000000e+00> : vector<1x8x128xf32>
    %176 = tpu.matmul %175, %13, %cst_47 {dimension_numbers = #tpu.dot_dimension_numbers<[2], [1], [1], [2], [0, 0, 0, 1, 1, 2], [0], [0]>} : vector<1x8x8xbf16>, vector<1x8x128xbf16>, vector<1x8x128xf32> -> vector<1x8x128xf32>
    %cst_48 = arith.constant 0.000000e+00 : f32
    "tpu.trace_stop"() : () -> ()
    %177 = vector.shape_cast %158 : vector<1x1x128xi1> to vector<1x1x128xi1>
    %178 = vector.broadcast %177 : vector<1x1x128xi1> to vector<1x8x128xi1>
    %179 = vector.broadcast %cst_48 : f32 to vector<1x8x128xf32>
    %180 = arith.select %178, %176, %179 : vector<1x8x128xi1>, vector<1x8x128xf32>
    %181 = arith.addf %148, %180 : vector<1x8x128xf32>
    %c50_i32_49 = arith.constant 50 : i32
    %182 = vector.broadcast %c50_i32_49 : i32 to vector<1x1x128xi32>
    %183 = arith.cmpi sge, %14, %182 : vector<1x1x128xi32>
    %c60_i32 = arith.constant 60 : i32
    %184 = vector.broadcast %c60_i32 : i32 to vector<1x1x128xi32>
    %185 = arith.cmpi slt, %14, %184 : vector<1x1x128xi32>
    %186 = arith.andi %183, %185 : vector<1x1x128xi1>
    %c50_i32_50 = arith.constant 50 : i32
    %187 = vector.broadcast %c50_i32_50 : i32 to vector<1x1x128xi32>
    %188 = arith.cmpi sge, %15, %187 : vector<1x1x128xi32>
    %c60_i32_51 = arith.constant 60 : i32
    %189 = vector.broadcast %c60_i32_51 : i32 to vector<1x1x128xi32>
    %190 = arith.cmpi slt, %15, %189 : vector<1x1x128xi32>
    %191 = arith.andi %188, %190 : vector<1x1x128xi1>
    %c0_i32_52 = arith.constant 0 : i32
    %192 = arith.sitofp %c0_i32_52 : i32 to bf16
    %193 = vector.shape_cast %186 : vector<1x1x128xi1> to vector<1x1x128xi1>
    %194 = vector.broadcast %193 : vector<1x1x128xi1> to vector<1x8x128xi1>
    %195 = vector.broadcast %192 : bf16 to vector<1x8x128xbf16>
    %196 = arith.select %194, %10, %195 : vector<1x8x128xi1>, vector<1x8x128xbf16>
    "tpu.trace_start"() <{level = 10 : i32, message = "bqd,bkd->bqk"}> : () -> ()
    %cst_53 = arith.constant dense<0.000000e+00> : vector<1x8x8xf32>
    %197 = tpu.matmul %7, %196, %cst_53 {dimension_numbers = #tpu.dot_dimension_numbers<[2], [2], [1], [1], [0, 0, 0, 1, 1, 1], [0], [0]>} : vector<1x8x128xbf16>, vector<1x8x128xbf16>, vector<1x8x8xf32> -> vector<1x8x8xf32>
    "tpu.trace_stop"() : () -> ()
    %cst_54 = arith.constant dense<0xFF800000> : vector<1x8xf32>
    %198 = vector.multi_reduction <maximumf>, %197, %cst_54 [2] : vector<1x8x8xf32> to vector<1x8xf32>
    %199 = vector.shape_cast %198 : vector<1x8xf32> to vector<1x8x1xf32>
    %200 = vector.broadcast %199 : vector<1x8x1xf32> to vector<1x8x8xf32>
    %201 = arith.subf %197, %200 : vector<1x8x8xf32>
    %202 = math.exp %201 : vector<1x8x8xf32>
    %cst_55 = arith.constant dense<0.000000e+00> : vector<1x8xf32>
    %203 = vector.multi_reduction <add>, %202, %cst_55 [2] : vector<1x8x8xf32> to vector<1x8xf32>
    %204 = vector.shape_cast %203 : vector<1x8xf32> to vector<1x8x1xf32>
    %205 = tpu.reciprocal %204 {approx = true} : vector<1x8x1xf32> -> vector<1x8x1xf32>
    %206 = vector.broadcast %205 : vector<1x8x1xf32> to vector<1x8x8xf32>
    %207 = arith.mulf %202, %206 : vector<1x8x8xf32>
    %208 = arith.truncf %207 : vector<1x8x8xf32> to vector<1x8x8xbf16>
    "tpu.trace_start"() <{level = 10 : i32, message = "bqk,bkd->bqd"}> : () -> ()
    %cst_56 = arith.constant dense<0.000000e+00> : vector<1x8x128xf32>
    %209 = tpu.matmul %208, %13, %cst_56 {dimension_numbers = #tpu.dot_dimension_numbers<[2], [1], [1], [2], [0, 0, 0, 1, 1, 2], [0], [0]>} : vector<1x8x8xbf16>, vector<1x8x128xbf16>, vector<1x8x128xf32> -> vector<1x8x128xf32>
    %cst_57 = arith.constant 0.000000e+00 : f32
    "tpu.trace_stop"() : () -> ()
    %210 = vector.shape_cast %191 : vector<1x1x128xi1> to vector<1x1x128xi1>
    %211 = vector.broadcast %210 : vector<1x1x128xi1> to vector<1x8x128xi1>
    %212 = vector.broadcast %cst_57 : f32 to vector<1x8x128xf32>
    %213 = arith.select %211, %209, %212 : vector<1x8x128xi1>, vector<1x8x128xf32>
    %214 = arith.addf %181, %213 : vector<1x8x128xf32>
    %c60_i32_58 = arith.constant 60 : i32
    %215 = vector.broadcast %c60_i32_58 : i32 to vector<1x1x128xi32>
    %216 = arith.cmpi sge, %14, %215 : vector<1x1x128xi32>
    %c70_i32 = arith.constant 70 : i32
    %217 = vector.broadcast %c70_i32 : i32 to vector<1x1x128xi32>
    %218 = arith.cmpi slt, %14, %217 : vector<1x1x128xi32>
    %219 = arith.andi %216, %218 : vector<1x1x128xi1>
    %c60_i32_59 = arith.constant 60 : i32
    %220 = vector.broadcast %c60_i32_59 : i32 to vector<1x1x128xi32>
    %221 = arith.cmpi sge, %15, %220 : vector<1x1x128xi32>
    %c70_i32_60 = arith.constant 70 : i32
    %222 = vector.broadcast %c70_i32_60 : i32 to vector<1x1x128xi32>
    %223 = arith.cmpi slt, %15, %222 : vector<1x1x128xi32>
    %224 = arith.andi %221, %223 : vector<1x1x128xi1>
    %c0_i32_61 = arith.constant 0 : i32
    %225 = arith.sitofp %c0_i32_61 : i32 to bf16
    %226 = vector.shape_cast %219 : vector<1x1x128xi1> to vector<1x1x128xi1>
    %227 = vector.broadcast %226 : vector<1x1x128xi1> to vector<1x8x128xi1>
    %228 = vector.broadcast %225 : bf16 to vector<1x8x128xbf16>
    %229 = arith.select %227, %10, %228 : vector<1x8x128xi1>, vector<1x8x128xbf16>
    "tpu.trace_start"() <{level = 10 : i32, message = "bqd,bkd->bqk"}> : () -> ()
    %cst_62 = arith.constant dense<0.000000e+00> : vector<1x8x8xf32>
    %230 = tpu.matmul %7, %229, %cst_62 {dimension_numbers = #tpu.dot_dimension_numbers<[2], [2], [1], [1], [0, 0, 0, 1, 1, 1], [0], [0]>} : vector<1x8x128xbf16>, vector<1x8x128xbf16>, vector<1x8x8xf32> -> vector<1x8x8xf32>
    "tpu.trace_stop"() : () -> ()
    %cst_63 = arith.constant dense<0xFF800000> : vector<1x8xf32>
    %231 = vector.multi_reduction <maximumf>, %230, %cst_63 [2] : vector<1x8x8xf32> to vector<1x8xf32>
    %232 = vector.shape_cast %231 : vector<1x8xf32> to vector<1x8x1xf32>
    %233 = vector.broadcast %232 : vector<1x8x1xf32> to vector<1x8x8xf32>
    %234 = arith.subf %230, %233 : vector<1x8x8xf32>
    %235 = math.exp %234 : vector<1x8x8xf32>
    %cst_64 = arith.constant dense<0.000000e+00> : vector<1x8xf32>
    %236 = vector.multi_reduction <add>, %235, %cst_64 [2] : vector<1x8x8xf32> to vector<1x8xf32>
    %237 = vector.shape_cast %236 : vector<1x8xf32> to vector<1x8x1xf32>
    %238 = tpu.reciprocal %237 {approx = true} : vector<1x8x1xf32> -> vector<1x8x1xf32>
    %239 = vector.broadcast %238 : vector<1x8x1xf32> to vector<1x8x8xf32>
    %240 = arith.mulf %235, %239 : vector<1x8x8xf32>
    %241 = arith.truncf %240 : vector<1x8x8xf32> to vector<1x8x8xbf16>
    "tpu.trace_start"() <{level = 10 : i32, message = "bqk,bkd->bqd"}> : () -> ()
    %cst_65 = arith.constant dense<0.000000e+00> : vector<1x8x128xf32>
    %242 = tpu.matmul %241, %13, %cst_65 {dimension_numbers = #tpu.dot_dimension_numbers<[2], [1], [1], [2], [0, 0, 0, 1, 1, 2], [0], [0]>} : vector<1x8x8xbf16>, vector<1x8x128xbf16>, vector<1x8x128xf32> -> vector<1x8x128xf32>
    %cst_66 = arith.constant 0.000000e+00 : f32
    "tpu.trace_stop"() : () -> ()
    %243 = vector.shape_cast %224 : vector<1x1x128xi1> to vector<1x1x128xi1>
    %244 = vector.broadcast %243 : vector<1x1x128xi1> to vector<1x8x128xi1>
    %245 = vector.broadcast %cst_66 : f32 to vector<1x8x128xf32>
    %246 = arith.select %244, %242, %245 : vector<1x8x128xi1>, vector<1x8x128xf32>
    %247 = arith.addf %214, %246 : vector<1x8x128xf32>
    %c70_i32_67 = arith.constant 70 : i32
    %248 = vector.broadcast %c70_i32_67 : i32 to vector<1x1x128xi32>
    %249 = arith.cmpi sge, %14, %248 : vector<1x1x128xi32>
    %c80_i32 = arith.constant 80 : i32
    %250 = vector.broadcast %c80_i32 : i32 to vector<1x1x128xi32>
    %251 = arith.cmpi slt, %14, %250 : vector<1x1x128xi32>
    %252 = arith.andi %249, %251 : vector<1x1x128xi1>
    %c70_i32_68 = arith.constant 70 : i32
    %253 = vector.broadcast %c70_i32_68 : i32 to vector<1x1x128xi32>
    %254 = arith.cmpi sge, %15, %253 : vector<1x1x128xi32>
    %c80_i32_69 = arith.constant 80 : i32
    %255 = vector.broadcast %c80_i32_69 : i32 to vector<1x1x128xi32>
    %256 = arith.cmpi slt, %15, %255 : vector<1x1x128xi32>
    %257 = arith.andi %254, %256 : vector<1x1x128xi1>
    %c0_i32_70 = arith.constant 0 : i32
    %258 = arith.sitofp %c0_i32_70 : i32 to bf16
    %259 = vector.shape_cast %252 : vector<1x1x128xi1> to vector<1x1x128xi1>
    %260 = vector.broadcast %259 : vector<1x1x128xi1> to vector<1x8x128xi1>
    %261 = vector.broadcast %258 : bf16 to vector<1x8x128xbf16>
    %262 = arith.select %260, %10, %261 : vector<1x8x128xi1>, vector<1x8x128xbf16>
    "tpu.trace_start"() <{level = 10 : i32, message = "bqd,bkd->bqk"}> : () -> ()
    %cst_71 = arith.constant dense<0.000000e+00> : vector<1x8x8xf32>
    %263 = tpu.matmul %7, %262, %cst_71 {dimension_numbers = #tpu.dot_dimension_numbers<[2], [2], [1], [1], [0, 0, 0, 1, 1, 1], [0], [0]>} : vector<1x8x128xbf16>, vector<1x8x128xbf16>, vector<1x8x8xf32> -> vector<1x8x8xf32>
    "tpu.trace_stop"() : () -> ()
    %cst_72 = arith.constant dense<0xFF800000> : vector<1x8xf32>
    %264 = vector.multi_reduction <maximumf>, %263, %cst_72 [2] : vector<1x8x8xf32> to vector<1x8xf32>
    %265 = vector.shape_cast %264 : vector<1x8xf32> to vector<1x8x1xf32>
    %266 = vector.broadcast %265 : vector<1x8x1xf32> to vector<1x8x8xf32>
    %267 = arith.subf %263, %266 : vector<1x8x8xf32>
    %268 = math.exp %267 : vector<1x8x8xf32>
    %cst_73 = arith.constant dense<0.000000e+00> : vector<1x8xf32>
    %269 = vector.multi_reduction <add>, %268, %cst_73 [2] : vector<1x8x8xf32> to vector<1x8xf32>
    %270 = vector.shape_cast %269 : vector<1x8xf32> to vector<1x8x1xf32>
    %271 = tpu.reciprocal %270 {approx = true} : vector<1x8x1xf32> -> vector<1x8x1xf32>
    %272 = vector.broadcast %271 : vector<1x8x1xf32> to vector<1x8x8xf32>
    %273 = arith.mulf %268, %272 : vector<1x8x8xf32>
    %274 = arith.truncf %273 : vector<1x8x8xf32> to vector<1x8x8xbf16>
    "tpu.trace_start"() <{level = 10 : i32, message = "bqk,bkd->bqd"}> : () -> ()
    %cst_74 = arith.constant dense<0.000000e+00> : vector<1x8x128xf32>
    %275 = tpu.matmul %274, %13, %cst_74 {dimension_numbers = #tpu.dot_dimension_numbers<[2], [1], [1], [2], [0, 0, 0, 1, 1, 2], [0], [0]>} : vector<1x8x8xbf16>, vector<1x8x128xbf16>, vector<1x8x128xf32> -> vector<1x8x128xf32>
    %cst_75 = arith.constant 0.000000e+00 : f32
    "tpu.trace_stop"() : () -> ()
    %276 = vector.shape_cast %257 : vector<1x1x128xi1> to vector<1x1x128xi1>
    %277 = vector.broadcast %276 : vector<1x1x128xi1> to vector<1x8x128xi1>
    %278 = vector.broadcast %cst_75 : f32 to vector<1x8x128xf32>
    %279 = arith.select %277, %275, %278 : vector<1x8x128xi1>, vector<1x8x128xf32>
    %280 = arith.addf %247, %279 : vector<1x8x128xf32>
    %c0_76 = arith.constant 0 : index
    %c0_77 = arith.constant 0 : index
    %c0_78 = arith.constant 0 : index
    %281 = vector.load %arg3[%c0_76, %c0_77, %c0_78] : memref<1x8x128xf32, #tpu.memory_space<vmem>>, vector<1x8x128xf32>
    tpu.vector_store %arg3[%c0_76, %c0_77, %c0_78], %280 {strides = array<i32>} : memref<1x8x128xf32, #tpu.memory_space<vmem>>, vector<1x8x128xf32>,
    return
  }
  func.func @transform_0(%arg0: i32) -> (i32, i32, i32) {
    %c0_i32 = arith.constant 0 : i32
    %c0_i32_0 = arith.constant 0 : i32
    %c0_i32_1 = arith.constant 0 : i32
    return %arg0, %c0_i32, %c0_i32_0 : i32, i32, i32
  }
  func.func @transform_1(%arg0: i32) -> (i32, i32) {
    %c0_i32 = arith.constant 0 : i32
    %c0_i32_0 = arith.constant 0 : i32
    %c0_i32_1 = arith.constant 0 : i32
    return %c0_i32, %c0_i32_0 : i32, i32
  }
  func.func @transform_2(%arg0: i32) -> (i32, i32, i32) {
    %c0_i32 = arith.constant 0 : i32
    %c0_i32_0 = arith.constant 0 : i32
    %c0_i32_1 = arith.constant 0 : i32
    return %arg0, %c0_i32, %c0_i32_0 : i32, i32, i32
  }
}

</mosaic_0001>

<llo_original>
// kernel: apply.1
$region0: #{apply.1}
  #allocation0 [shape = 'u32[]', space=smem, size = 0x4, offset = 0x4, fixed_abs, tag = 'smem constant byte address 0x4 - core index']
  #allocation1 [shape = 'u32[144,128]{1,0:T(1,128)}', space=vmem, size = 0x12000, scoped, tag = 'internal scratch']
  %s0 = inlined_call_operand.hbm [shape: f32[2,8,283], index: 0, kind: input, shape index: {}]
  %s1 = inlined_call_operand.hbm [shape: bf16[283,384], index: 1, kind: input, shape index: {}]
  %s2 = inlined_call_operand.hbm [shape: f32[2,8,128], index: 2, kind: output, shape index: {}]
  %s3 = sld [smem:[#allocation0]]
  $region49: #{apply.1} parent=0
    _
  %s5 = ssub.s32 1, %s3
  %s6 = scalar_select 0, %s5, %s3
  $region1: #{apply.1} parent=0
    #allocation2 [shape = 'u8[24576]{0}', space=vmem, size = 0x6000, scoped, tag = 'input window, operand 0']
    #allocation3 [shape = 's32[2]{0}', space=sflag, size = 0x8, scoped, tag = 'scoped memory for apply.1']
    #allocation4 [shape = 's32[2]{0}', space=sflag, size = 0x8, scoped, tag = 'scoped memory for apply.1']
    #allocation5 [shape = 'u8[221184]{0}', space=vmem, size = 0x36000, scoped, tag = 'input window, operand 1, single buffered']
    #allocation6 [shape = 's32[1]{0}', space=sflag, size = 0x4, scoped, tag = 'scoped memory for apply.1']
    #allocation7 [shape = 'u8[8192]{0}', space=vmem, size = 0x2000, scoped, tag = 'output window, operand 0']
    %7 = vsyncpa [#allocation3], 0
    %s8 = scalar_lea.sflag [#allocation3], 1
    %9 = vsyncpa %s8, 0
    %10 = vsyncpa [#allocation6], 0
    %11 = vsyncpa [#allocation4], 0
    %s12 = scalar_lea.sflag [#allocation4], 1
    %13 = vsyncpa %s12, 0
    loop: start=0, step=1, limit=4
    $region2: #{apply.1} parent=1 // loop_pre_header
      _
    $region3: #{apply.1} parent=1 // loop_header
      %s15 = sphi 0, %s19
      %p16 = scmp.ge.s32.totalorder %s15, 4
      %s25 = sphi 0, %s27
      %s28 = sphi 0, %s25
      %s29 = sphi 0, %s28
      %s45 = sphi 0, %s29
      %s49 = sphi 0, %s49
      %s51 = sphi 0, %s49
      %s52 = sphi 0, %s51
      %s66 = sphi 0, %s52
      %s72 = sphi 0, %s74
      %s75 = sphi 0, %s72
      %s76 = sphi 0, %s75
      %s92 = sphi 0, %s76
    $region4: #{apply.1} parent=1 // loop_header_branch
      %18 = sbr.rel (%p16) target = $region8
    $region5: #{apply.1} parent=1 // loop_body
      %s20 = ssub.s32 %s15, 1
      %s21 = ssub.s32 %s15, 2
      %s22 = sadd.s32 %s15, 1
      %s23 = ssub.s32 %s15, %s22
      %p24 = scmp.eq.s32.totalorder %s23, 0
      %s26 = sadd.s32 %s25, 1
      %s27 = scalar_select %p24, %s25, %s26
      %p30 = pneg %p24
      %p31 = scmp.eq.s32.totalorder %s15, 1
      %p32 = por %p30, %p31
      %p33 = scmp.ne.s32.totalorder %s25, %s28
      %p34 = scmp.eq.s32.totalorder %s15, 0
      %p35 = por %p33, %p34
      %p36 = scmp.ne.s32.totalorder %s25, %s28
      %p37 = scmp.eq.s32.totalorder %s20, 1
      %p38 = por %p36, %p37
      %p39 = scmp.ne.s32.totalorder %s28, %s29
      %p40 = scmp.eq.s32.totalorder %s20, 0
      %p41 = por %p39, %p40
      %p42 = scmp.ne.s32.totalorder %s28, %s29
      %p43 = scmp.eq.s32.totalorder %s21, 1
      %p44 = por %p42, %p43
      %p46 = scmp.ne.s32.totalorder %s29, %s45
      %p47 = scmp.eq.s32.totalorder %s21, 0
      %p48 = por %p46, %p47
      %s50 = sadd.s32 %s49, 1
      %p53 = scmp.eq.s32.totalorder %s15, 1
      %p54 = scmp.ne.s32.totalorder %s49, %s51
      %p55 = scmp.eq.s32.totalorder %s15, 0
      %p56 = por %p54, %p55
      %p57 = scmp.ne.s32.totalorder %s49, %s51
      %p58 = scmp.eq.s32.totalorder %s20, 1
      %p59 = por %p57, %p58
      %p60 = scmp.ne.s32.totalorder %s51, %s52
      %p61 = scmp.eq.s32.totalorder %s20, 0
      %p62 = por %p60, %p61
      %p63 = scmp.ne.s32.totalorder %s51, %s52
      %p64 = scmp.eq.s32.totalorder %s21, 1
      %p65 = por %p63, %p64
      %p67 = scmp.ne.s32.totalorder %s52, %s66
      %p68 = scmp.eq.s32.totalorder %s21, 0
      %p69 = por %p67, %p68
      %s70 = ssub.s32 %s15, %s22
      %p71 = scmp.eq.s32.totalorder %s70, 0
      %s73 = sadd.s32 %s72, 1
      %s74 = scalar_select %p71, %s72, %s73
      %p77 = pneg %p71
      %p78 = scmp.eq.s32.totalorder %s15, 1
      %p79 = por %p77, %p78
      %p80 = scmp.ne.s32.totalorder %s72, %s75
      %p81 = scmp.eq.s32.totalorder %s15, 0
      %p82 = por %p80, %p81
      %p83 = scmp.ne.s32.totalorder %s72, %s75
      %p84 = scmp.eq.s32.totalorder %s20, 1
      %p85 = por %p83, %p84
      %p86 = scmp.ne.s32.totalorder %s75, %s76
      %p87 = scmp.eq.s32.totalorder %s20, 0
      %p88 = por %p86, %p87
      %p89 = scmp.ne.s32.totalorder %s75, %s76
      %p90 = scmp.eq.s32.totalorder %s21, 1
      %p91 = por %p89, %p90
      %p93 = scmp.ne.s32.totalorder %s76, %s92
      %p94 = scmp.eq.s32.totalorder %s21, 0
      %p95 = por %p93, %p94
      %p96 = scmp.le.s32.totalorder 1, %s15
      %p97 = scmp.lt.s32.totalorder %s15, 3
      %p98 = pnand %p96, %p97
      %p99 = pneg %p98
      // Predicated region
      $region9: #{apply.1} parent=5 // pred_check
        _
      $region10: #{apply.1} parent=5 // pred_check_branch
        %101 = sbr.rel (%p98) target = $region12
      $region11: #{apply.1} parent=5 // pred_region
        %s102 = ssub.s32 %s15, 1
        // Predicated region
        $region13: #{apply.1} parent=11 // pred_check
          %p103 = pneg %p62
        $region14: #{apply.1} parent=11 // pred_check_branch
          %105 = sbr.rel (%p103) target = $region16
        $region15: #{apply.1} parent=11 // pred_region
          %s107 = ssub.s32 6912, 6912
          %108 = vsyncadd [#allocation6], %s107
          %s109 = sshll.u32 [#allocation5], 4
          %s110 = int_to_ptr.vmem [resolvable:$true] %s109
          %115 = dma.hbm_to_vmem [thread:$0]  %s1, 6912, %s110, [#allocation6], 192, 192, 12
        $region16: #{apply.1} parent=11 // pred_fallthru
          _
      $region12: #{apply.1} parent=5 // pred_fallthru
        _
      %p116 = scmp.lt.s32.totalorder %s15, 2
      // Predicated region
      $region17: #{apply.1} parent=5 // pred_check
        %p117 = pneg %p116
      $region18: #{apply.1} parent=5 // pred_check_branch
        %119 = sbr.rel (%p117) target = $region20
      $region19: #{apply.1} parent=5 // pred_region
        // Predicated region
        $region21: #{apply.1} parent=19 // pred_check
          %p120 = pneg %p35
        $region22: #{apply.1} parent=19 // pred_check_branch
          %122 = sbr.rel (%p120) target = $region24
        $region23: #{apply.1} parent=19 // pred_region
          %s123 = sand.u32 %s25, 1
          %s124 = scalar_lea.sflag [#allocation3], %s123
          %s125 = sand.u32 %s25, 1
          %s126 = smul.addr %s125, 24
          %s127 = scalar_lea.vmem [#allocation2], %s126
          %s129 = ssub.s32 384, 384
          %130 = vsyncadd %s124, %s129
          %s131 = smul.addr %s15, 3
          %s132 = smul.addr %s131, 128
          %s133 = scalar_lea.hbm %s0, %s132
          %s135 = sshll.u32 %s127, 4
          %s136 = int_to_ptr.vmem [resolvable:$true] %s135
          %138 = dma.hbm_to_vmem [thread:$0]  %s133, 384, %s136, %s124
        $region24: #{apply.1} parent=19 // pred_fallthru
          _
      $region20: #{apply.1} parent=5 // pred_fallthru
        _
      %p139 = scmp.le.s32.totalorder 1, %s15
      %p140 = scmp.lt.s32.totalorder %s15, 3
      %p141 = pnand %p139, %p140
      %p142 = pneg %p141
      // Predicated region
      $region25: #{apply.1} parent=5 // pred_check
        _
      $region26: #{apply.1} parent=5 // pred_check_branch
        %144 = sbr.rel (%p141) target = $region28
      $region27: #{apply.1} parent=5 // pred_region
        %s145 = ssub.s32 %s15, 1
        %s146 = sand.u32 %s28, 1
        %s147 = scalar_lea.sflag [#allocation3], %s146
        %s148 = sand.u32 %s28, 1
        %s149 = smul.addr %s148, 24
        %s150 = scalar_lea.vmem [#allocation2], %s149
        // Predicated region
        $region29: #{apply.1} parent=27 // pred_check
          %p151 = pneg %p41
        $region30: #{apply.1} parent=27 // pred_check_branch
          %153 = sbr.rel (%p151) target = $region32
        $region31: #{apply.1} parent=27 // pred_region
          %154 = dma.done %s147, 384
        $region32: #{apply.1} parent=27 // pred_fallthru
          _
        // Predicated region
        $region33: #{apply.1} parent=27 // pred_check
          %p155 = pneg %p62
        $region34: #{apply.1} parent=27 // pred_check_branch
          %157 = sbr.rel (%p155) target = $region36
        $region35: #{apply.1} parent=27 // pred_region
          %158 = dma.done [#allocation6], 6912
        $region36: #{apply.1} parent=27 // pred_fallthru
          _
        %s159 = sand.u32 %s28, 1
        %s160 = scalar_lea.sflag [#allocation3], %s159
        %s161 = sand.u32 %s28, 1
        %s162 = smul.addr %s161, 24
        %s163 = scalar_lea.vmem [#allocation2], %s162
        %p164 = pneg %p41
        %p165 = pneg %p38
        %p166 = pneg %p62
        %p167 = pneg %p59
        %p168 = pneg %p88
        %p169 = pneg %p85
        %s170 = sand.u32 %s75, 1
        %s171 = scalar_lea.sflag [#allocation4], %s170
        %s172 = sand.u32 %s75, 1
        %s173 = smul.addr %s172, 8
        %s174 = scalar_lea.vmem [#allocation7], %s173
        %v176 = vld [vmem:[%s150] sm:$0xff]
        %v177 = vld [vmem:[%s150 + $0x8] sm:$0xff]
        %v178 = vld [vmem:[%s150 + $0x10] sm:$0xff]
        %v179 = vpack.c.bf16 %v176, %v176
        %v180 = vpack.c.bf16 %v177, %v177
        %v181 = vpack.c.bf16 %v178, %v178
        %v182 = vld [vmem:[#allocation5] sm:$0xff]
        %v183 = vld [vmem:[#allocation5 + $0x8] sm:$0xf]
        %v184 = vld [vmem:[#allocation5 + $0xc] sm:$0xff]
        %v185 = vld [vmem:[#allocation5 + $0x14] sm:$0xf]
        %v186 = vld [vmem:[#allocation5 + $0x18] sm:$0xff]
        %v187 = vld [vmem:[#allocation5 + $0x20] sm:$0xf]
        %v188 = vld [vmem:[#allocation5 + $0x24] sm:$0xff]
        %v189 = vld [vmem:[#allocation5 + $0x2c] sm:$0xf]
        %v190 = vld [vmem:[#allocation5 + $0x30] sm:$0xff]
        %v191 = vld [vmem:[#allocation5 + $0x38] sm:$0xf]
        %v192 = vld [vmem:[#allocation5 + $0x3c] sm:$0xff]
        %v193 = vld [vmem:[#allocation5 + $0x44] sm:$0xf]
        %v194 = vld [vmem:[#allocation5 + $0x48] sm:$0xff]
        %v195 = vld [vmem:[#allocation5 + $0x50] sm:$0xf]
        %v196 = vld [vmem:[#allocation5 + $0x54] sm:$0xff]
        %v197 = vld [vmem:[#allocation5 + $0x5c] sm:$0xf]
        %v198 = vld [vmem:[#allocation5 + $0x60] sm:$0xff]
        %v199 = vld [vmem:[#allocation5 + $0x68] sm:$0xf]
        %v200 = vld [vmem:[#allocation5 + $0x6c] sm:$0xff]
        %v201 = vld [vmem:[#allocation5 + $0x74] sm:$0xf]
        %v202 = vld [vmem:[#allocation5 + $0x78] sm:$0xff]
        %v203 = vld [vmem:[#allocation5 + $0x80] sm:$0xf]
        %v204 = vld [vmem:[#allocation5 + $0x84] sm:$0xff]
        %v205 = vld [vmem:[#allocation5 + $0x8c] sm:$0xf]
        %v206 = vld [vmem:[#allocation5 + $0x90] sm:$0xff]
        %v207 = vld [vmem:[#allocation5 + $0x98] sm:$0xf]
        %v208 = vld [vmem:[#allocation5 + $0x9c] sm:$0xff]
        %v209 = vld [vmem:[#allocation5 + $0xa4] sm:$0xf]
        %v210 = vld [vmem:[#allocation5 + $0xa8] sm:$0xff]
        %v211 = vld [vmem:[#allocation5 + $0xb0] sm:$0xf]
        %v212 = vld [vmem:[#allocation5 + $0xb4] sm:$0xff]
        %v213 = vld [vmem:[#allocation5 + $0xbc] sm:$0xf]
        %v214 = vld [vmem:[#allocation5 + $0xc0] sm:$0xff]
        %v215 = vld [vmem:[#allocation5 + $0xc8] sm:$0xf]
        %v216 = vld [vmem:[#allocation5 + $0xcc] sm:$0xff]
        %v217 = vld [vmem:[#allocation5 + $0xd4] sm:$0xf]
        %v218 = vld [vmem:[#allocation5 + $0xd8] sm:$0xff]
        %v219 = vld [vmem:[#allocation5 + $0xe0] sm:$0xf]
        %v220 = vld [vmem:[#allocation5 + $0xe4] sm:$0xff]
        %v221 = vld [vmem:[#allocation5 + $0xec] sm:$0xf]
        %v222 = vld [vmem:[#allocation5 + $0xf0] sm:$0xff]
        %v223 = vld [vmem:[#allocation5 + $0xf8] sm:$0xf]
        %v224 = vld [vmem:[#allocation5 + $0xfc] sm:$0xff]
        %v225 = vld [vmem:[#allocation5 + $0x104] sm:$0xf]
        %v226 = vld [vmem:[#allocation5 + $0x108] sm:$0xff]
        %v227 = vld [vmem:[#allocation5 + $0x110] sm:$0xf]
        %v228 = vld [vmem:[#allocation5 + $0x114] sm:$0xff]
        %v229 = vld [vmem:[#allocation5 + $0x11c] sm:$0xf]
        %v230 = vld [vmem:[#allocation5 + $0x120] sm:$0xff]
        %v231 = vld [vmem:[#allocation5 + $0x128] sm:$0xf]
        %v232 = vld [vmem:[#allocation5 + $0x12c] sm:$0xff]
        %v233 = vld [vmem:[#allocation5 + $0x134] sm:$0xf]
        %v234 = vld [vmem:[#allocation5 + $0x138] sm:$0xff]
        %v235 = vld [vmem:[#allocation5 + $0x140] sm:$0xf]
        %v236 = vld [vmem:[#allocation5 + $0x144] sm:$0xff]
        %v237 = vld [vmem:[#allocation5 + $0x14c] sm:$0xf]
        %v238 = vld [vmem:[#allocation5 + $0x150] sm:$0xff]
        %v239 = vld [vmem:[#allocation5 + $0x158] sm:$0xf]
        %v240 = vld [vmem:[#allocation5 + $0x15c] sm:$0xff]
        %v241 = vld [vmem:[#allocation5 + $0x164] sm:$0xf]
        %v242 = vld [vmem:[#allocation5 + $0x168] sm:$0xff]
        %v243 = vld [vmem:[#allocation5 + $0x170] sm:$0xf]
        %v244 = vld [vmem:[#allocation5 + $0x174] sm:$0xff]
        %v245 = vld [vmem:[#allocation5 + $0x17c] sm:$0xf]
        %v246 = vld [vmem:[#allocation5 + $0x180] sm:$0xff]
        %v247 = vld [vmem:[#allocation5 + $0x188] sm:$0xf]
        %v248 = vld [vmem:[#allocation5 + $0x18c] sm:$0xff]
        %v249 = vld [vmem:[#allocation5 + $0x194] sm:$0xf]
        %v250 = vld [vmem:[#allocation5 + $0x198] sm:$0xff]
        %v251 = vld [vmem:[#allocation5 + $0x1a0] sm:$0xf]
        %v252 = vld [vmem:[#allocation5 + $0x1a4] sm:$0x33]
        %v253 = vld [vmem:[#allocation5 + $0x1ac] sm:$0x3]
        %v326 = vunpack.c.l.b16 %v182
        %v327 = vunpack.c.h.b16 %v182
        %v328 = vunpack.c.l.b16 %v183
        %v329 = vunpack.c.l.b16 %v184
        %v330 = vunpack.c.h.b16 %v184
        %v331 = vunpack.c.l.b16 %v185
        %v332 = vunpack.c.l.b16 %v186
        %v333 = vunpack.c.h.b16 %v186
        %v334 = vunpack.c.l.b16 %v187
        %v335 = vunpack.c.l.b16 %v188
        %v336 = vunpack.c.h.b16 %v188
        %v337 = vunpack.c.l.b16 %v189
        %v338 = vunpack.c.l.b16 %v190
        %v339 = vunpack.c.h.b16 %v190
        %v340 = vunpack.c.l.b16 %v191
        %v341 = vunpack.c.l.b16 %v192
        %v342 = vunpack.c.h.b16 %v192
        %v343 = vunpack.c.l.b16 %v193
        %v344 = vunpack.c.l.b16 %v194
        %v345 = vunpack.c.h.b16 %v194
        %v346 = vunpack.c.l.b16 %v195
        %v347 = vunpack.c.l.b16 %v196
        %v348 = vunpack.c.h.b16 %v196
        %v349 = vunpack.c.l.b16 %v197
        %v350 = vunpack.c.l.b16 %v198
        %v351 = vunpack.c.h.b16 %v198
        %v352 = vunpack.c.l.b16 %v199
        %v353 = vunpack.c.l.b16 %v200
        %v354 = vunpack.c.h.b16 %v200
        %v355 = vunpack.c.l.b16 %v201
        %v356 = vunpack.c.l.b16 %v202
        %v357 = vunpack.c.h.b16 %v202
        %v358 = vunpack.c.l.b16 %v203
        %v359 = vunpack.c.l.b16 %v204
        %v360 = vunpack.c.h.b16 %v204
        %v361 = vunpack.c.l.b16 %v205
        %v362 = vunpack.c.l.b16 %v206
        %v363 = vunpack.c.h.b16 %v206
        %v364 = vunpack.c.l.b16 %v207
        %v365 = vunpack.c.l.b16 %v208
        %v366 = vunpack.c.h.b16 %v208
        %v367 = vunpack.c.l.b16 %v209
        %v368 = vunpack.c.l.b16 %v210
        %v369 = vunpack.c.h.b16 %v210
        %v370 = vunpack.c.l.b16 %v211
        %v371 = vunpack.c.l.b16 %v212
        %v372 = vunpack.c.h.b16 %v212
        %v373 = vunpack.c.l.b16 %v213
        %v374 = vunpack.c.l.b16 %v214
        %v375 = vunpack.c.h.b16 %v214
        %v376 = vunpack.c.l.b16 %v215
        %v377 = vunpack.c.l.b16 %v216
        %v378 = vunpack.c.h.b16 %v216
        %v379 = vunpack.c.l.b16 %v217
        %v380 = vunpack.c.l.b16 %v218
        %v381 = vunpack.c.h.b16 %v218
        %v382 = vunpack.c.l.b16 %v219
        %v383 = vunpack.c.l.b16 %v220
        %v384 = vunpack.c.h.b16 %v220
        %v385 = vunpack.c.l.b16 %v221
        %v386 = vunpack.c.l.b16 %v222
        %v387 = vunpack.c.h.b16 %v222
        %v388 = vunpack.c.l.b16 %v223
        %v389 = vunpack.c.l.b16 %v224
        %v390 = vunpack.c.h.b16 %v224
        %v391 = vunpack.c.l.b16 %v225
        %v392 = vunpack.c.l.b16 %v226
        %v393 = vunpack.c.h.b16 %v226
        %v394 = vunpack.c.l.b16 %v227
        %v395 = vunpack.c.l.b16 %v228
        %v396 = vunpack.c.h.b16 %v228
        %v397 = vunpack.c.l.b16 %v229
        %v398 = vunpack.c.l.b16 %v230
        %v399 = vunpack.c.h.b16 %v230
        %v400 = vunpack.c.l.b16 %v231
        %v401 = vunpack.c.l.b16 %v232
        %v402 = vunpack.c.h.b16 %v232
        %v403 = vunpack.c.l.b16 %v233
        %v404 = vunpack.c.l.b16 %v234
        %v405 = vunpack.c.h.b16 %v234
        %v406 = vunpack.c.l.b16 %v235
        %v407 = vunpack.c.l.b16 %v236
        %v408 = vunpack.c.h.b16 %v236
        %v409 = vunpack.c.l.b16 %v237
        %v410 = vunpack.c.l.b16 %v238
        %v411 = vunpack.c.h.b16 %v238
        %v412 = vunpack.c.l.b16 %v239
        %v413 = vunpack.c.l.b16 %v240
        %v414 = vunpack.c.h.b16 %v240
        %v415 = vunpack.c.l.b16 %v241
        %v416 = vunpack.c.l.b16 %v242
        %v417 = vunpack.c.h.b16 %v242
        %v418 = vunpack.c.l.b16 %v243
        %v419 = vunpack.c.l.b16 %v244
        %v420 = vunpack.c.h.b16 %v244
        %v421 = vunpack.c.l.b16 %v245
        %v422 = vunpack.c.l.b16 %v246
        %v423 = vunpack.c.h.b16 %v246
        %v424 = vunpack.c.l.b16 %v247
        %v425 = vunpack.c.l.b16 %v248
        %v426 = vunpack.c.h.b16 %v248
        %v427 = vunpack.c.l.b16 %v249
        %v428 = vunpack.c.l.b16 %v250
        %v429 = vunpack.c.h.b16 %v250
        %v430 = vunpack.c.l.b16 %v251
        %v431 = vunpack.c.l.b16 %v252
        %v432 = vunpack.c.h.b16 %v252
        %v433 = vunpack.c.l.b16 %v253
        %v434 = vpack.c.b16 %v329, %v326
        %v435 = vpack.c.b16 %v330, %v327
        %v436 = vpack.c.b16 %v331, %v328
        %v437 = vpack.c.b16 %v335, %v332
        %v438 = vpack.c.b16 %v336, %v333
        %v439 = vpack.c.b16 %v337, %v334
        %v440 = vpack.c.b16 %v341, %v338
        %v441 = vpack.c.b16 %v342, %v339
        %v442 = vpack.c.b16 %v343, %v340
        %v443 = vpack.c.b16 %v347, %v344
        %v444 = vpack.c.b16 %v348, %v345
        %v445 = vpack.c.b16 %v349, %v346
        %v446 = vpack.c.b16 %v353, %v350
        %v447 = vpack.c.b16 %v354, %v351
        %v448 = vpack.c.b16 %v355, %v352
        %v449 = vpack.c.b16 %v359, %v356
        %v450 = vpack.c.b16 %v360, %v357
        %v451 = vpack.c.b16 %v361, %v358
        %v452 = vpack.c.b16 %v365, %v362
        %v453 = vpack.c.b16 %v366, %v363
        %v454 = vpack.c.b16 %v367, %v364
        %v455 = vpack.c.b16 %v371, %v368
        %v456 = vpack.c.b16 %v372, %v369
        %v457 = vpack.c.b16 %v373, %v370
        %v458 = vpack.c.b16 %v377, %v374
        %v459 = vpack.c.b16 %v378, %v375
        %v460 = vpack.c.b16 %v379, %v376
        %v461 = vpack.c.b16 %v383, %v380
        %v462 = vpack.c.b16 %v384, %v381
        %v463 = vpack.c.b16 %v385, %v382
        %v464 = vpack.c.b16 %v389, %v386
        %v465 = vpack.c.b16 %v390, %v387
        %v466 = vpack.c.b16 %v391, %v388
        %v467 = vpack.c.b16 %v395, %v392
        %v468 = vpack.c.b16 %v396, %v393
        %v469 = vpack.c.b16 %v397, %v394
        %v470 = vpack.c.b16 %v401, %v398
        %v471 = vpack.c.b16 %v402, %v399
        %v472 = vpack.c.b16 %v403, %v400
        %v473 = vpack.c.b16 %v407, %v404
        %v474 = vpack.c.b16 %v408, %v405
        %v475 = vpack.c.b16 %v409, %v406
        %v476 = vpack.c.b16 %v413, %v410
        %v477 = vpack.c.b16 %v414, %v411
        %v478 = vpack.c.b16 %v415, %v412
        %v479 = vpack.c.b16 %v419, %v416
        %v480 = vpack.c.b16 %v420, %v417
        %v481 = vpack.c.b16 %v421, %v418
        %v482 = vpack.c.b16 %v425, %v422
        %v483 = vpack.c.b16 %v426, %v423
        %v484 = vpack.c.b16 %v427, %v424
        %v485 = vpack.c.b16 %v431, %v428
        %v486 = vpack.c.b16 %v432, %v429
        %v487 = vpack.c.b16 %v433, %v430
        %vm539 = vcmask 220160
        %v541 = vsel %vm539, %v181, 0
        %vm543 = vcmask 1044480
        %vm544 = vcmask 1045504
        %v545 = vsel %vm543, 4294967295, 65535
        %v546 = vsel %vm544, %v545, 0
        %v548 = vand.u32 %v485, %v546
        %v551 = vand.u32 %v486, %v546
        %v554 = vand.u32 %v487, %v546
        %556 = vmatprep.subr.bf16.mxu0 %v456
        %557 = vmatpush1.bf16.msra.mxu0 %v455
        %558 = vmatprep.subr.bf16.mxu0 %v453
        %559 = vmatpush1.bf16.msra.mxu0 %v452
        %560 = vmatprep.subr.bf16.mxu0 %v450
        %561 = vmatpush1.bf16.msra.mxu0 %v449
        %562 = vmatprep.subr.bf16.mxu0 %v447
        %563 = vmatpush1.bf16.msra.mxu0 %v446
        %564 = vmatprep.subr.bf16.mxu0 %v444
        %565 = vmatpush1.bf16.msra.mxu0 %v443
        %566 = vmatprep.subr.bf16.mxu0 %v441
        %567 = vmatpush1.bf16.msra.mxu0 %v440
        %568 = vmatprep.subr.bf16.mxu0 %v438
        %569 = vmatpush1.bf16.msra.mxu0 %v437
        %570 = vmatprep.subr.bf16.mxu0 %v435
        %571 = vmatpush1.bf16.msra.mxu0 %v434
        %572 = vmatprep.subr.bf16.mxu0 %v480
        %573 = vmatpush2.bf16.msra.mxu0 %v479
        %574 = vmatprep.subr.bf16.mxu0 %v477
        %575 = vmatpush2.bf16.msra.mxu0 %v476
        %576 = vmatprep.subr.bf16.mxu0 %v474
        %577 = vmatpush2.bf16.msra.mxu0 %v473
        %578 = vmatprep.subr.bf16.mxu0 %v471
        %579 = vmatpush2.bf16.msra.mxu0 %v470
        %580 = vmatprep.subr.bf16.mxu0 %v468
        %581 = vmatpush2.bf16.msra.mxu0 %v467
        %582 = vmatprep.subr.bf16.mxu0 %v465
        %583 = vmatpush2.bf16.msra.mxu0 %v464
        %584 = vmatprep.subr.bf16.mxu0 %v462
        %585 = vmatpush2.bf16.msra.mxu0 %v461
        %586 = vmatprep.subr.bf16.mxu0 %v459
        %587 = vmatpush2.bf16.msra.mxu0 %v458
        %588 = vmatprep.mubr.bf16.mxu0 %v180
        %589 = vmatmul.mubr.bf16.gmra.mxu0 %v179
        %v590 = vpop.f32.mrf.mxu0
        %v591 = vadd.f32 0.0, %v590
        %v592 = vpop.f32.mrf.mxu0
        %v593 = vadd.f32 0.0, %v592
        %v594 = vpop.f32.mrf.mxu0
        %v595 = vpop.f32.mrf.mxu0
        %596 = vdwg.mxu0
        %597 = vmatprep.subr.bf16.mxu0 0
        %598 = vmatpush1.bf16.msra.mxu0 0
        %599 = vmatprep.subr.bf16.mxu0 0
        %600 = vmatpush1.bf16.msra.mxu0 0
        %601 = vmatprep.subr.bf16.mxu0 0
        %602 = vmatpush1.bf16.msra.mxu0 0
        %603 = vmatprep.subr.bf16.mxu0 0
        %604 = vmatpush1.bf16.msra.mxu0 0
        %605 = vmatprep.subr.bf16.mxu0 0
        %606 = vmatpush1.bf16.msra.mxu0 0
        %607 = vmatprep.subr.bf16.mxu0 0
        %608 = vmatpush1.bf16.msra.mxu0 0
        %609 = vmatprep.subr.bf16.mxu0 %v551
        %610 = vmatpush1.bf16.msra.mxu0 %v548
        %611 = vmatprep.subr.bf16.mxu0 %v483
        %612 = vmatpush1.bf16.msra.mxu0 %v482
        %613 = vmatprep.subr.bf16.mxu0 0
        %614 = vmatpush2.bf16.msra.mxu0 0
        %615 = vmatprep.subr.bf16.mxu0 0
        %616 = vmatpush2.bf16.msra.mxu0 0
        %617 = vmatprep.subr.bf16.mxu0 0
        %618 = vmatpush2.bf16.msra.mxu0 0
        %619 = vmatprep.subr.bf16.mxu0 0
        %620 = vmatpush2.bf16.msra.mxu0 0
        %621 = vmatprep.subr.bf16.mxu0 0
        %622 = vmatpush2.bf16.msra.mxu0 0
        %623 = vmatprep.subr.bf16.mxu0 0
        %624 = vmatpush2.bf16.msra.mxu0 0
        %625 = vmatprep.subr.bf16.mxu0 0
        %626 = vmatpush2.bf16.msra.mxu0 0
        %627 = vmatprep.subr.bf16.mxu0 0
        %628 = vmatpush2.bf16.msra.mxu0 0
        %629 = vmatprep.mubr.bf16.mxu0 0
        %630 = vmatmul.mubr.bf16.gmra.mxu0 %v541
        %v631 = vpop.f32.mrf.mxu0
        %v632 = vadd.f32 %v591, %v631
        %v633 = vpop.f32.mrf.mxu0
        %v634 = vadd.f32 %v593, %v633
        %v635 = vpop.f32.mrf.mxu0
        %v636 = vpop.f32.mrf.mxu0
        %637 = vdwg.mxu0
        %638 = vmatprep.subr.bf16.mxu0 0
        %639 = vmatpush1.bf16.msra.mxu0 %v457
        %640 = vmatprep.subr.bf16.mxu0 0
        %641 = vmatpush1.bf16.msra.mxu0 %v454
        %642 = vmatprep.subr.bf16.mxu0 0
        %643 = vmatpush1.bf16.msra.mxu0 %v451
        %644 = vmatprep.subr.bf16.mxu0 0
        %645 = vmatpush1.bf16.msra.mxu0 %v448
        %646 = vmatprep.subr.bf16.mxu0 0
        %647 = vmatpush1.bf16.msra.mxu0 %v445
        %648 = vmatprep.subr.bf16.mxu0 0
        %649 = vmatpush1.bf16.msra.mxu0 %v442
        %650 = vmatprep.subr.bf16.mxu0 0
        %651 = vmatpush1.bf16.msra.mxu0 %v439
        %652 = vmatprep.subr.bf16.mxu0 0
        %653 = vmatpush1.bf16.msra.mxu0 %v436
        %654 = vmatprep.subr.bf16.mxu0 0
        %655 = vmatpush2.bf16.msra.mxu0 %v481
        %656 = vmatprep.subr.bf16.mxu0 0
        %657 = vmatpush2.bf16.msra.mxu0 %v478
        %658 = vmatprep.subr.bf16.mxu0 0
        %659 = vmatpush2.bf16.msra.mxu0 %v475
        %660 = vmatprep.subr.bf16.mxu0 0
        %661 = vmatpush2.bf16.msra.mxu0 %v472
        %662 = vmatprep.subr.bf16.mxu0 0
        %663 = vmatpush2.bf16.msra.mxu0 %v469
        %664 = vmatprep.subr.bf16.mxu0 0
        %665 = vmatpush2.bf16.msra.mxu0 %v466
        %666 = vmatprep.subr.bf16.mxu0 0
        %667 = vmatpush2.bf16.msra.mxu0 %v463
        %668 = vmatprep.subr.bf16.mxu0 0
        %669 = vmatpush2.bf16.msra.mxu0 %v460
        %670 = vmatprep.mubr.bf16.mxu0 %v180
        %671 = vmatmul.mubr.bf16.gmra.mxu0 %v179
        %v672 = vpop.f32.mrf.mxu0
        %v673 = vadd.f32 0.0, %v672
        %v674 = vpop.f32.mrf.mxu0
        %v675 = vpop.f32.mrf.mxu0
        %v676 = vpop.f32.mrf.mxu0
        %677 = vdwg.mxu0
        %678 = vmatprep.subr.bf16.mxu0 0
        %679 = vmatpush1.bf16.msra.mxu0 0
        %680 = vmatprep.subr.bf16.mxu0 0
        %681 = vmatpush1.bf16.msra.mxu0 0
        %682 = vmatprep.subr.bf16.mxu0 0
        %683 = vmatpush1.bf16.msra.mxu0 0
        %684 = vmatprep.subr.bf16.mxu0 0
        %685 = vmatpush1.bf16.msra.mxu0 0
        %686 = vmatprep.subr.bf16.mxu0 0
        %687 = vmatpush1.bf16.msra.mxu0 0
        %688 = vmatprep.subr.bf16.mxu0 0
        %689 = vmatpush1.bf16.msra.mxu0 0
        %690 = vmatprep.subr.bf16.mxu0 0
        %691 = vmatpush1.bf16.msra.mxu0 %v554
        %692 = vmatprep.subr.bf16.mxu0 0
        %693 = vmatpush1.bf16.msra.mxu0 %v484
        %694 = vmatprep.subr.bf16.mxu0 0
        %695 = vmatpush2.bf16.msra.mxu0 0
        %696 = vmatprep.subr.bf16.mxu0 0
        %697 = vmatpush2.bf16.msra.mxu0 0
        %698 = vmatprep.subr.bf16.mxu0 0
        %699 = vmatpush2.bf16.msra.mxu0 0
        %700 = vmatprep.subr.bf16.mxu0 0
        %701 = vmatpush2.bf16.msra.mxu0 0
        %702 = vmatprep.subr.bf16.mxu0 0
        %703 = vmatpush2.bf16.msra.mxu0 0
        %704 = vmatprep.subr.bf16.mxu0 0
        %705 = vmatpush2.bf16.msra.mxu0 0
        %706 = vmatprep.subr.bf16.mxu0 0
        %707 = vmatpush2.bf16.msra.mxu0 0
        %708 = vmatprep.subr.bf16.mxu0 0
        %709 = vmatpush2.bf16.msra.mxu0 0
        %710 = vmatprep.mubr.bf16.mxu0 0
        %711 = vmatmul.mubr.bf16.gmra.mxu0 %v541
        %v712 = vpop.f32.mrf.mxu0
        %v713 = vadd.f32 %v673, %v712
        %v714 = vpop.f32.mrf.mxu0
        %v715 = vpop.f32.mrf.mxu0
        %v716 = vpop.f32.mrf.mxu0
        %717 = vdwg.mxu0
        %v718 = vpack.c.bf16 %v632, %v632
        %v719 = vpack.c.bf16 %v634, %v634
        %v720 = vpack.c.bf16 %v713, %v713
        %v721 = vlaneseq
        %v722 = vand.u32 %v721, 127
        %vm723 = vcmp.ge.s32.totalorder %v722, 0
        %vm724 = vcmp.lt.s32.totalorder %v722, 10
        %vm725 = vmand %vm723, %vm724
        %v726 = vsel %vm725, 1, 0
        %vm727 = vcmp.eq.s32.totalorder %v726, 1
        %vm728 = vmpackc.low %vm727, %vm727
        %v729 = vsel %vm728, %v719, 0
        %730 = vmatprep.subr.bf16.mxu0 0
        %731 = vmatpush1.bf16.xpose.msra.mxu0 0
        %732 = vmatprep.subr.bf16.mxu0 0
        %733 = vmatpush1.bf16.xpose.msra.mxu0 0
        %734 = vmatprep.subr.bf16.mxu0 0
        %735 = vmatpush1.bf16.xpose.msra.mxu0 0
        %736 = vmatprep.subr.bf16.mxu0 0
        %737 = vmatpush1.bf16.xpose.msra.mxu0 0
        %738 = vmatprep.subr.bf16.mxu0 0
        %739 = vmatpush1.bf16.xpose.msra.mxu0 0
        %740 = vmatprep.subr.bf16.mxu0 0
        %741 = vmatpush1.bf16.xpose.msra.mxu0 0
        %742 = vmatprep.subr.bf16.mxu0 0
        %743 = vmatpush1.bf16.xpose.msra.mxu0 0
        %744 = vmatprep.subr.bf16.mxu0 0
        %745 = vmatpush1.bf16.xpose.msra.mxu0 %v729
        %746 = vmatprep.subr.bf16.mxu0 0
        %747 = vmatpush2.bf16.xpose.msra.mxu0 0
        %748 = vmatprep.subr.bf16.mxu0 0
        %749 = vmatpush2.bf16.xpose.msra.mxu0 0
        %750 = vmatprep.subr.bf16.mxu0 0
        %751 = vmatpush2.bf16.xpose.msra.mxu0 0
        %752 = vmatprep.subr.bf16.mxu0 0
        %753 = vmatpush2.bf16.xpose.msra.mxu0 0
        %754 = vmatprep.subr.bf16.mxu0 0
        %755 = vmatpush2.bf16.xpose.msra.mxu0 0
        %756 = vmatprep.subr.bf16.mxu0 0
        %757 = vmatpush2.bf16.xpose.msra.mxu0 0
        %758 = vmatprep.subr.bf16.mxu0 0
        %759 = vmatpush2.bf16.xpose.msra.mxu0 0
        %760 = vmatprep.subr.bf16.mxu0 0
        %761 = vmatpush2.bf16.xpose.msra.mxu0 0
        %762 = vmatprep.mubr.bf16.mxu0 0
        %763 = vmatmul.mubr.bf16.gmra.mxu0 %v718
        %v764 = vpop.f32.mrf.mxu0
        %v765 = vadd.f32 0.0, %v764
        %v766 = vpop.f32.mrf.mxu0
        %v767 = vpop.f32.mrf.mxu0
        %v768 = vpop.f32.mrf.mxu0
        %769 = vdwg.mxu0
        %vm770 = vcmask 64512
        %v771 = vsel %vm770, %v765, -inf
        %772 = vmax.xlane.f32.xlu0 %v771
        %v773 = vpop.xlane.xlu0 %772
        %v774 = vsub.f32 %v765, %v773
        %v775 = vmul.f32 %v774, 1.442695
        %v776 = vpow.pop %v775
        %v777 = vsel %vm770, %v776, 0.0
        %778 = vadd.xlane.f32.xlu0 %v777
        %v779 = vpop.xlane.xlu0 %778
        %v780 = vrcp.pop %v779
        %v781 = vmul.f32 %v776, %v780
        %v782 = vpack.c.bf16 %v781, %v781
        %v784 = vsel %vm770, %v782, 0
        %vm786 = vcmask 1043456
        %v788 = vsel %vm786, %v720, 0
        %790 = vmatprep.subr.bf16.mxu0 0
        %791 = vmatpush1.bf16.msra.mxu0 0
        %792 = vmatprep.subr.bf16.mxu0 0
        %793 = vmatpush1.bf16.msra.mxu0 0
        %794 = vmatprep.subr.bf16.mxu0 0
        %795 = vmatpush1.bf16.msra.mxu0 0
        %796 = vmatprep.subr.bf16.mxu0 0
        %797 = vmatpush1.bf16.msra.mxu0 0
        %798 = vmatprep.subr.bf16.mxu0 0
        %799 = vmatpush1.bf16.msra.mxu0 0
        %800 = vmatprep.subr.bf16.mxu0 0
        %801 = vmatpush1.bf16.msra.mxu0 0
        %802 = vmatprep.subr.bf16.mxu0 0
        %803 = vmatpush1.bf16.msra.mxu0 0
        %804 = vmatprep.subr.bf16.mxu0 0
        %805 = vmatpush1.bf16.msra.mxu0 %v788
        %806 = vmatprep.subr.bf16.mxu0 0
        %807 = vmatpush2.bf16.msra.mxu0 0
        %808 = vmatprep.subr.bf16.mxu0 0
        %809 = vmatpush2.bf16.msra.mxu0 0
        %810 = vmatprep.subr.bf16.mxu0 0
        %811 = vmatpush2.bf16.msra.mxu0 0
        %812 = vmatprep.subr.bf16.mxu0 0
        %813 = vmatpush2.bf16.msra.mxu0 0
        %814 = vmatprep.subr.bf16.mxu0 0
        %815 = vmatpush2.bf16.msra.mxu0 0
        %816 = vmatprep.subr.bf16.mxu0 0
        %817 = vmatpush2.bf16.msra.mxu0 0
        %818 = vmatprep.subr.bf16.mxu0 0
        %819 = vmatpush2.bf16.msra.mxu0 0
        %820 = vmatprep.subr.bf16.mxu0 0
        %821 = vmatpush2.bf16.msra.mxu0 0
        %822 = vmatprep.mubr.bf16.mxu0 0
        %823 = vmatmul.mubr.bf16.gmra.mxu0 %v784
        %v824 = vpop.f32.mrf.mxu0
        %v825 = vadd.f32 0.0, %v824
        %v826 = vpop.f32.mrf.mxu0
        %v827 = vpop.f32.mrf.mxu0
        %v828 = vpop.f32.mrf.mxu0
        %829 = vdwg.mxu0
        %v830 = vsel %vm727, %v825, 0.0
        %v831 = vadd.f32 %v830, 0.0
        %vm832 = vcmp.ge.s32.totalorder %v722, 10
        %vm833 = vcmp.lt.s32.totalorder %v722, 20
        %vm834 = vmand %vm832, %vm833
        %v835 = vsel %vm834, 1, 0
        %vm836 = vcmp.eq.s32.totalorder %v835, 1
        %vm837 = vmpackc.low %vm836, %vm836
        %v838 = vsel %vm837, %v719, 0
        %839 = vmatprep.subr.bf16.mxu0 0
        %840 = vmatpush1.bf16.xpose.msra.mxu0 0
        %841 = vmatprep.subr.bf16.mxu0 0
        %842 = vmatpush1.bf16.xpose.msra.mxu0 0
        %843 = vmatprep.subr.bf16.mxu0 0
        %844 = vmatpush1.bf16.xpose.msra.mxu0 0
        %845 = vmatprep.subr.bf16.mxu0 0
        %846 = vmatpush1.bf16.xpose.msra.mxu0 0
        %847 = vmatprep.subr.bf16.mxu0 0
        %848 = vmatpush1.bf16.xpose.msra.mxu0 0
        %849 = vmatprep.subr.bf16.mxu0 0
        %850 = vmatpush1.bf16.xpose.msra.mxu0 0
        %851 = vmatprep.subr.bf16.mxu0 0
        %852 = vmatpush1.bf16.xpose.msra.mxu0 0
        %853 = vmatprep.subr.bf16.mxu0 0
        %854 = vmatpush1.bf16.xpose.msra.mxu0 %v838
        %855 = vmatprep.subr.bf16.mxu0 0
        %856 = vmatpush2.bf16.xpose.msra.mxu0 0
        %857 = vmatprep.subr.bf16.mxu0 0
        %858 = vmatpush2.bf16.xpose.msra.mxu0 0
        %859 = vmatprep.subr.bf16.mxu0 0
        %860 = vmatpush2.bf16.xpose.msra.mxu0 0
        %861 = vmatprep.subr.bf16.mxu0 0
        %862 = vmatpush2.bf16.xpose.msra.mxu0 0
        %863 = vmatprep.subr.bf16.mxu0 0
        %864 = vmatpush2.bf16.xpose.msra.mxu0 0
        %865 = vmatprep.subr.bf16.mxu0 0
        %866 = vmatpush2.bf16.xpose.msra.mxu0 0
        %867 = vmatprep.subr.bf16.mxu0 0
        %868 = vmatpush2.bf16.xpose.msra.mxu0 0
        %869 = vmatprep.subr.bf16.mxu0 0
        %870 = vmatpush2.bf16.xpose.msra.mxu0 0
        %871 = vmatprep.mubr.bf16.mxu0 0
        %872 = vmatmul.mubr.bf16.gmra.mxu0 %v718
        %v873 = vpop.f32.mrf.mxu0
        %v874 = vadd.f32 0.0, %v873
        %v875 = vpop.f32.mrf.mxu0
        %v876 = vpop.f32.mrf.mxu0
        %v877 = vpop.f32.mrf.mxu0
        %878 = vdwg.mxu0
        %v879 = vsel %vm770, %v874, -inf
        %880 = vmax.xlane.f32.xlu0 %v879
        %v881 = vpop.xlane.xlu0 %880
        %v882 = vsub.f32 %v874, %v881
        %v883 = vmul.f32 %v882, 1.442695
        %v884 = vpow.pop %v883
        %v885 = vsel %vm770, %v884, 0.0
        %886 = vadd.xlane.f32.xlu0 %v885
        %v887 = vpop.xlane.xlu0 %886
        %v888 = vrcp.pop %v887
        %v889 = vmul.f32 %v884, %v888
        %v890 = vpack.c.bf16 %v889, %v889
        %v892 = vsel %vm770, %v890, 0
        %894 = vmatprep.subr.bf16.mxu0 0
        %895 = vmatpush1.bf16.msra.mxu0 0
        %896 = vmatprep.subr.bf16.mxu0 0
        %897 = vmatpush1.bf16.msra.mxu0 0
        %898 = vmatprep.subr.bf16.mxu0 0
        %899 = vmatpush1.bf16.msra.mxu0 0
        %900 = vmatprep.subr.bf16.mxu0 0
        %901 = vmatpush1.bf16.msra.mxu0 0
        %902 = vmatprep.subr.bf16.mxu0 0
        %903 = vmatpush1.bf16.msra.mxu0 0
        %904 = vmatprep.subr.bf16.mxu0 0
        %905 = vmatpush1.bf16.msra.mxu0 0
        %906 = vmatprep.subr.bf16.mxu0 0
        %907 = vmatpush1.bf16.msra.mxu0 0
        %908 = vmatprep.subr.bf16.mxu0 0
        %909 = vmatpush1.bf16.msra.mxu0 %v788
        %910 = vmatprep.subr.bf16.mxu0 0
        %911 = vmatpush2.bf16.msra.mxu0 0
        %912 = vmatprep.subr.bf16.mxu0 0
        %913 = vmatpush2.bf16.msra.mxu0 0
        %914 = vmatprep.subr.bf16.mxu0 0
        %915 = vmatpush2.bf16.msra.mxu0 0
        %916 = vmatprep.subr.bf16.mxu0 0
        %917 = vmatpush2.bf16.msra.mxu0 0
        %918 = vmatprep.subr.bf16.mxu0 0
        %919 = vmatpush2.bf16.msra.mxu0 0
        %920 = vmatprep.subr.bf16.mxu0 0
        %921 = vmatpush2.bf16.msra.mxu0 0
        %922 = vmatprep.subr.bf16.mxu0 0
        %923 = vmatpush2.bf16.msra.mxu0 0
        %924 = vmatprep.subr.bf16.mxu0 0
        %925 = vmatpush2.bf16.msra.mxu0 0
        %926 = vmatprep.mubr.bf16.mxu0 0
        %927 = vmatmul.mubr.bf16.gmra.mxu0 %v892
        %v928 = vpop.f32.mrf.mxu0
        %v929 = vadd.f32 0.0, %v928
        %v930 = vpop.f32.mrf.mxu0
        %v931 = vpop.f32.mrf.mxu0
        %v932 = vpop.f32.mrf.mxu0
        %933 = vdwg.mxu0
        %v934 = vsel %vm836, %v929, 0.0
        %v935 = vadd.f32 %v831, %v934
        %vm936 = vcmp.ge.s32.totalorder %v722, 20
        %vm937 = vcmp.lt.s32.totalorder %v722, 30
        %vm938 = vmand %vm936, %vm937
        %v939 = vsel %vm938, 1, 0
        %vm940 = vcmp.eq.s32.totalorder %v939, 1
        %vm941 = vmpackc.low %vm940, %vm940
        %v942 = vsel %vm941, %v719, 0
        %943 = vmatprep.subr.bf16.mxu0 0
        %944 = vmatpush1.bf16.xpose.msra.mxu0 0
        %945 = vmatprep.subr.bf16.mxu0 0
        %946 = vmatpush1.bf16.xpose.msra.mxu0 0
        %947 = vmatprep.subr.bf16.mxu0 0
        %948 = vmatpush1.bf16.xpose.msra.mxu0 0
        %949 = vmatprep.subr.bf16.mxu0 0
        %950 = vmatpush1.bf16.xpose.msra.mxu0 0
        %951 = vmatprep.subr.bf16.mxu0 0
        %952 = vmatpush1.bf16.xpose.msra.mxu0 0
        %953 = vmatprep.subr.bf16.mxu0 0
        %954 = vmatpush1.bf16.xpose.msra.mxu0 0
        %955 = vmatprep.subr.bf16.mxu0 0
        %956 = vmatpush1.bf16.xpose.msra.mxu0 0
        %957 = vmatprep.subr.bf16.mxu0 0
        %958 = vmatpush1.bf16.xpose.msra.mxu0 %v942
        %959 = vmatprep.subr.bf16.mxu0 0
        %960 = vmatpush2.bf16.xpose.msra.mxu0 0
        %961 = vmatprep.subr.bf16.mxu0 0
        %962 = vmatpush2.bf16.xpose.msra.mxu0 0
        %963 = vmatprep.subr.bf16.mxu0 0
        %964 = vmatpush2.bf16.xpose.msra.mxu0 0
        %965 = vmatprep.subr.bf16.mxu0 0
        %966 = vmatpush2.bf16.xpose.msra.mxu0 0
        %967 = vmatprep.subr.bf16.mxu0 0
        %968 = vmatpush2.bf16.xpose.msra.mxu0 0
        %969 = vmatprep.subr.bf16.mxu0 0
        %970 = vmatpush2.bf16.xpose.msra.mxu0 0
        %971 = vmatprep.subr.bf16.mxu0 0
        %972 = vmatpush2.bf16.xpose.msra.mxu0 0
        %973 = vmatprep.subr.bf16.mxu0 0
        %974 = vmatpush2.bf16.xpose.msra.mxu0 0
        %975 = vmatprep.mubr.bf16.mxu0 0
        %976 = vmatmul.mubr.bf16.gmra.mxu0 %v718
        %v977 = vpop.f32.mrf.mxu0
        %v978 = vadd.f32 0.0, %v977
        %v979 = vpop.f32.mrf.mxu0
        %v980 = vpop.f32.mrf.mxu0
        %v981 = vpop.f32.mrf.mxu0
        %982 = vdwg.mxu0
        %v983 = vsel %vm770, %v978, -inf
        %984 = vmax.xlane.f32.xlu0 %v983
        %v985 = vpop.xlane.xlu0 %984
        %v986 = vsub.f32 %v978, %v985
        %v987 = vmul.f32 %v986, 1.442695
        %v988 = vpow.pop %v987
        %v989 = vsel %vm770, %v988, 0.0
        %990 = vadd.xlane.f32.xlu0 %v989
        %v991 = vpop.xlane.xlu0 %990
        %v992 = vrcp.pop %v991
        %v993 = vmul.f32 %v988, %v992
        %v994 = vpack.c.bf16 %v993, %v993
        %v996 = vsel %vm770, %v994, 0
        %998 = vmatprep.subr.bf16.mxu0 0
        %999 = vmatpush1.bf16.msra.mxu0 0
        %1000 = vmatprep.subr.bf16.mxu0 0
        %1001 = vmatpush1.bf16.msra.mxu0 0
        %1002 = vmatprep.subr.bf16.mxu0 0
        %1003 = vmatpush1.bf16.msra.mxu0 0
        %1004 = vmatprep.subr.bf16.mxu0 0
        %1005 = vmatpush1.bf16.msra.mxu0 0
        %1006 = vmatprep.subr.bf16.mxu0 0
        %1007 = vmatpush1.bf16.msra.mxu0 0
        %1008 = vmatprep.subr.bf16.mxu0 0
        %1009 = vmatpush1.bf16.msra.mxu0 0
        %1010 = vmatprep.subr.bf16.mxu0 0
        %1011 = vmatpush1.bf16.msra.mxu0 0
        %1012 = vmatprep.subr.bf16.mxu0 0
        %1013 = vmatpush1.bf16.msra.mxu0 %v788
        %1014 = vmatprep.subr.bf16.mxu0 0
        %1015 = vmatpush2.bf16.msra.mxu0 0
        %1016 = vmatprep.subr.bf16.mxu0 0
        %1017 = vmatpush2.bf16.msra.mxu0 0
        %1018 = vmatprep.subr.bf16.mxu0 0
        %1019 = vmatpush2.bf16.msra.mxu0 0
        %1020 = vmatprep.subr.bf16.mxu0 0
        %1021 = vmatpush2.bf16.msra.mxu0 0
        %1022 = vmatprep.subr.bf16.mxu0 0
        %1023 = vmatpush2.bf16.msra.mxu0 0
        %1024 = vmatprep.subr.bf16.mxu0 0
        %1025 = vmatpush2.bf16.msra.mxu0 0
        %1026 = vmatprep.subr.bf16.mxu0 0
        %1027 = vmatpush2.bf16.msra.mxu0 0
        %1028 = vmatprep.subr.bf16.mxu0 0
        %1029 = vmatpush2.bf16.msra.mxu0 0
        %1030 = vmatprep.mubr.bf16.mxu0 0
        %1031 = vmatmul.mubr.bf16.gmra.mxu0 %v996
        %v1032 = vpop.f32.mrf.mxu0
        %v1033 = vadd.f32 0.0, %v1032
        %v1034 = vpop.f32.mrf.mxu0
        %v1035 = vpop.f32.mrf.mxu0
        %v1036 = vpop.f32.mrf.mxu0
        %1037 = vdwg.mxu0
        %v1038 = vsel %vm940, %v1033, 0.0
        %v1039 = vadd.f32 %v935, %v1038
        %vm1040 = vcmp.ge.s32.totalorder %v722, 30
        %vm1041 = vcmp.lt.s32.totalorder %v722, 40
        %vm1042 = vmand %vm1040, %vm1041
        %v1043 = vsel %vm1042, 1, 0
        %vm1044 = vcmp.eq.s32.totalorder %v1043, 1
        %vm1045 = vmpackc.low %vm1044, %vm1044
        %v1046 = vsel %vm1045, %v719, 0
        %1047 = vmatprep.subr.bf16.mxu0 0
        %1048 = vmatpush1.bf16.xpose.msra.mxu0 0
        %1049 = vmatprep.subr.bf16.mxu0 0
        %1050 = vmatpush1.bf16.xpose.msra.mxu0 0
        %1051 = vmatprep.subr.bf16.mxu0 0
        %1052 = vmatpush1.bf16.xpose.msra.mxu0 0
        %1053 = vmatprep.subr.bf16.mxu0 0
        %1054 = vmatpush1.bf16.xpose.msra.mxu0 0
        %1055 = vmatprep.subr.bf16.mxu0 0
        %1056 = vmatpush1.bf16.xpose.msra.mxu0 0
        %1057 = vmatprep.subr.bf16.mxu0 0
        %1058 = vmatpush1.bf16.xpose.msra.mxu0 0
        %1059 = vmatprep.subr.bf16.mxu0 0
        %1060 = vmatpush1.bf16.xpose.msra.mxu0 0
        %1061 = vmatprep.subr.bf16.mxu0 0
        %1062 = vmatpush1.bf16.xpose.msra.mxu0 %v1046
        %1063 = vmatprep.subr.bf16.mxu0 0
        %1064 = vmatpush2.bf16.xpose.msra.mxu0 0
        %1065 = vmatprep.subr.bf16.mxu0 0
        %1066 = vmatpush2.bf16.xpose.msra.mxu0 0
        %1067 = vmatprep.subr.bf16.mxu0 0
        %1068 = vmatpush2.bf16.xpose.msra.mxu0 0
        %1069 = vmatprep.subr.bf16.mxu0 0
        %1070 = vmatpush2.bf16.xpose.msra.mxu0 0
        %1071 = vmatprep.subr.bf16.mxu0 0
        %1072 = vmatpush2.bf16.xpose.msra.mxu0 0
        %1073 = vmatprep.subr.bf16.mxu0 0
        %1074 = vmatpush2.bf16.xpose.msra.mxu0 0
        %1075 = vmatprep.subr.bf16.mxu0 0
        %1076 = vmatpush2.bf16.xpose.msra.mxu0 0
        %1077 = vmatprep.subr.bf16.mxu0 0
        %1078 = vmatpush2.bf16.xpose.msra.mxu0 0
        %1079 = vmatprep.mubr.bf16.mxu0 0
        %1080 = vmatmul.mubr.bf16.gmra.mxu0 %v718
        %v1081 = vpop.f32.mrf.mxu0
        %v1082 = vadd.f32 0.0, %v1081
        %v1083 = vpop.f32.mrf.mxu0
        %v1084 = vpop.f32.mrf.mxu0
        %v1085 = vpop.f32.mrf.mxu0
        %1086 = vdwg.mxu0
        %v1087 = vsel %vm770, %v1082, -inf
        %1088 = vmax.xlane.f32.xlu0 %v1087
        %v1089 = vpop.xlane.xlu0 %1088
        %v1090 = vsub.f32 %v1082, %v1089
        %v1091 = vmul.f32 %v1090, 1.442695
        %v1092 = vpow.pop %v1091
        %v1093 = vsel %vm770, %v1092, 0.0
        %1094 = vadd.xlane.f32.xlu0 %v1093
        %v1095 = vpop.xlane.xlu0 %1094
        %v1096 = vrcp.pop %v1095
        %v1097 = vmul.f32 %v1092, %v1096
        %v1098 = vpack.c.bf16 %v1097, %v1097
        %v1100 = vsel %vm770, %v1098, 0
        %1102 = vmatprep.subr.bf16.mxu0 0
        %1103 = vmatpush1.bf16.msra.mxu0 0
        %1104 = vmatprep.subr.bf16.mxu0 0
        %1105 = vmatpush1.bf16.msra.mxu0 0
        %1106 = vmatprep.subr.bf16.mxu0 0
        %1107 = vmatpush1.bf16.msra.mxu0 0
        %1108 = vmatprep.subr.bf16.mxu0 0
        %1109 = vmatpush1.bf16.msra.mxu0 0
        %1110 = vmatprep.subr.bf16.mxu0 0
        %1111 = vmatpush1.bf16.msra.mxu0 0
        %1112 = vmatprep.subr.bf16.mxu0 0
        %1113 = vmatpush1.bf16.msra.mxu0 0
        %1114 = vmatprep.subr.bf16.mxu0 0
        %1115 = vmatpush1.bf16.msra.mxu0 0
        %1116 = vmatprep.subr.bf16.mxu0 0
        %1117 = vmatpush1.bf16.msra.mxu0 %v788
        %1118 = vmatprep.subr.bf16.mxu0 0
        %1119 = vmatpush2.bf16.msra.mxu0 0
        %1120 = vmatprep.subr.bf16.mxu0 0
        %1121 = vmatpush2.bf16.msra.mxu0 0
        %1122 = vmatprep.subr.bf16.mxu0 0
        %1123 = vmatpush2.bf16.msra.mxu0 0
        %1124 = vmatprep.subr.bf16.mxu0 0
        %1125 = vmatpush2.bf16.msra.mxu0 0
        %1126 = vmatprep.subr.bf16.mxu0 0
        %1127 = vmatpush2.bf16.msra.mxu0 0
        %1128 = vmatprep.subr.bf16.mxu0 0
        %1129 = vmatpush2.bf16.msra.mxu0 0
        %1130 = vmatprep.subr.bf16.mxu0 0
        %1131 = vmatpush2.bf16.msra.mxu0 0
        %1132 = vmatprep.subr.bf16.mxu0 0
        %1133 = vmatpush2.bf16.msra.mxu0 0
        %1134 = vmatprep.mubr.bf16.mxu0 0
        %1135 = vmatmul.mubr.bf16.gmra.mxu0 %v1100
        %v1136 = vpop.f32.mrf.mxu0
        %v1137 = vadd.f32 0.0, %v1136
        %v1138 = vpop.f32.mrf.mxu0
        %v1139 = vpop.f32.mrf.mxu0
        %v1140 = vpop.f32.mrf.mxu0
        %1141 = vdwg.mxu0
        %v1142 = vsel %vm1044, %v1137, 0.0
        %v1143 = vadd.f32 %v1039, %v1142
        %vm1144 = vcmp.ge.s32.totalorder %v722, 40
        %vm1145 = vcmp.lt.s32.totalorder %v722, 50
        %vm1146 = vmand %vm1144, %vm1145
        %v1147 = vsel %vm1146, 1, 0
        %vm1148 = vcmp.eq.s32.totalorder %v1147, 1
        %vm1149 = vmpackc.low %vm1148, %vm1148
        %v1150 = vsel %vm1149, %v719, 0
        %1151 = vmatprep.subr.bf16.mxu0 0
        %1152 = vmatpush1.bf16.xpose.msra.mxu0 0
        %1153 = vmatprep.subr.bf16.mxu0 0
        %1154 = vmatpush1.bf16.xpose.msra.mxu0 0
        %1155 = vmatprep.subr.bf16.mxu0 0
        %1156 = vmatpush1.bf16.xpose.msra.mxu0 0
        %1157 = vmatprep.subr.bf16.mxu0 0
        %1158 = vmatpush1.bf16.xpose.msra.mxu0 0
        %1159 = vmatprep.subr.bf16.mxu0 0
        %1160 = vmatpush1.bf16.xpose.msra.mxu0 0
        %1161 = vmatprep.subr.bf16.mxu0 0
        %1162 = vmatpush1.bf16.xpose.msra.mxu0 0
        %1163 = vmatprep.subr.bf16.mxu0 0
        %1164 = vmatpush1.bf16.xpose.msra.mxu0 0
        %1165 = vmatprep.subr.bf16.mxu0 0
        %1166 = vmatpush1.bf16.xpose.msra.mxu0 %v1150
        %1167 = vmatprep.subr.bf16.mxu0 0
        %1168 = vmatpush2.bf16.xpose.msra.mxu0 0
        %1169 = vmatprep.subr.bf16.mxu0 0
        %1170 = vmatpush2.bf16.xpose.msra.mxu0 0
        %1171 = vmatprep.subr.bf16.mxu0 0
        %1172 = vmatpush2.bf16.xpose.msra.mxu0 0
        %1173 = vmatprep.subr.bf16.mxu0 0
        %1174 = vmatpush2.bf16.xpose.msra.mxu0 0
        %1175 = vmatprep.subr.bf16.mxu0 0
        %1176 = vmatpush2.bf16.xpose.msra.mxu0 0
        %1177 = vmatprep.subr.bf16.mxu0 0
        %1178 = vmatpush2.bf16.xpose.msra.mxu0 0
        %1179 = vmatprep.subr.bf16.mxu0 0
        %1180 = vmatpush2.bf16.xpose.msra.mxu0 0
        %1181 = vmatprep.subr.bf16.mxu0 0
        %1182 = vmatpush2.bf16.xpose.msra.mxu0 0
        %1183 = vmatprep.mubr.bf16.mxu0 0
        %1184 = vmatmul.mubr.bf16.gmra.mxu0 %v718
        %v1185 = vpop.f32.mrf.mxu0
        %v1186 = vadd.f32 0.0, %v1185
        %v1187 = vpop.f32.mrf.mxu0
        %v1188 = vpop.f32.mrf.mxu0
        %v1189 = vpop.f32.mrf.mxu0
        %1190 = vdwg.mxu0
        %v1191 = vsel %vm770, %v1186, -inf
        %1192 = vmax.xlane.f32.xlu0 %v1191
        %v1193 = vpop.xlane.xlu0 %1192
        %v1194 = vsub.f32 %v1186, %v1193
        %v1195 = vmul.f32 %v1194, 1.442695
        %v1196 = vpow.pop %v1195
        %v1197 = vsel %vm770, %v1196, 0.0
        %1198 = vadd.xlane.f32.xlu0 %v1197
        %v1199 = vpop.xlane.xlu0 %1198
        %v1200 = vrcp.pop %v1199
        %v1201 = vmul.f32 %v1196, %v1200
        %v1202 = vpack.c.bf16 %v1201, %v1201
        %v1204 = vsel %vm770, %v1202, 0
        %1206 = vmatprep.subr.bf16.mxu0 0
        %1207 = vmatpush1.bf16.msra.mxu0 0
        %1208 = vmatprep.subr.bf16.mxu0 0
        %1209 = vmatpush1.bf16.msra.mxu0 0
        %1210 = vmatprep.subr.bf16.mxu0 0
        %1211 = vmatpush1.bf16.msra.mxu0 0
        %1212 = vmatprep.subr.bf16.mxu0 0
        %1213 = vmatpush1.bf16.msra.mxu0 0
        %1214 = vmatprep.subr.bf16.mxu0 0
        %1215 = vmatpush1.bf16.msra.mxu0 0
        %1216 = vmatprep.subr.bf16.mxu0 0
        %1217 = vmatpush1.bf16.msra.mxu0 0
        %1218 = vmatprep.subr.bf16.mxu0 0
        %1219 = vmatpush1.bf16.msra.mxu0 0
        %1220 = vmatprep.subr.bf16.mxu0 0
        %1221 = vmatpush1.bf16.msra.mxu0 %v788
        %1222 = vmatprep.subr.bf16.mxu0 0
        %1223 = vmatpush2.bf16.msra.mxu0 0
        %1224 = vmatprep.subr.bf16.mxu0 0
        %1225 = vmatpush2.bf16.msra.mxu0 0
        %1226 = vmatprep.subr.bf16.mxu0 0
        %1227 = vmatpush2.bf16.msra.mxu0 0
        %1228 = vmatprep.subr.bf16.mxu0 0
        %1229 = vmatpush2.bf16.msra.mxu0 0
        %1230 = vmatprep.subr.bf16.mxu0 0
        %1231 = vmatpush2.bf16.msra.mxu0 0
        %1232 = vmatprep.subr.bf16.mxu0 0
        %1233 = vmatpush2.bf16.msra.mxu0 0
        %1234 = vmatprep.subr.bf16.mxu0 0
        %1235 = vmatpush2.bf16.msra.mxu0 0
        %1236 = vmatprep.subr.bf16.mxu0 0
        %1237 = vmatpush2.bf16.msra.mxu0 0
        %1238 = vmatprep.mubr.bf16.mxu0 0
        %1239 = vmatmul.mubr.bf16.gmra.mxu0 %v1204
        %v1240 = vpop.f32.mrf.mxu0
        %v1241 = vadd.f32 0.0, %v1240
        %v1242 = vpop.f32.mrf.mxu0
        %v1243 = vpop.f32.mrf.mxu0
        %v1244 = vpop.f32.mrf.mxu0
        %1245 = vdwg.mxu0
        %v1246 = vsel %vm1148, %v1241, 0.0
        %v1247 = vadd.f32 %v1143, %v1246
        %vm1248 = vcmp.ge.s32.totalorder %v722, 50
        %vm1249 = vcmp.lt.s32.totalorder %v722, 60
        %vm1250 = vmand %vm1248, %vm1249
        %v1251 = vsel %vm1250, 1, 0
        %vm1252 = vcmp.eq.s32.totalorder %v1251, 1
        %vm1253 = vmpackc.low %vm1252, %vm1252
        %v1254 = vsel %vm1253, %v719, 0
        %1255 = vmatprep.subr.bf16.mxu0 0
        %1256 = vmatpush1.bf16.xpose.msra.mxu0 0
        %1257 = vmatprep.subr.bf16.mxu0 0
        %1258 = vmatpush1.bf16.xpose.msra.mxu0 0
        %1259 = vmatprep.subr.bf16.mxu0 0
        %1260 = vmatpush1.bf16.xpose.msra.mxu0 0
        %1261 = vmatprep.subr.bf16.mxu0 0
        %1262 = vmatpush1.bf16.xpose.msra.mxu0 0
        %1263 = vmatprep.subr.bf16.mxu0 0
        %1264 = vmatpush1.bf16.xpose.msra.mxu0 0
        %1265 = vmatprep.subr.bf16.mxu0 0
        %1266 = vmatpush1.bf16.xpose.msra.mxu0 0
        %1267 = vmatprep.subr.bf16.mxu0 0
        %1268 = vmatpush1.bf16.xpose.msra.mxu0 0
        %1269 = vmatprep.subr.bf16.mxu0 0
        %1270 = vmatpush1.bf16.xpose.msra.mxu0 %v1254
        %1271 = vmatprep.subr.bf16.mxu0 0
        %1272 = vmatpush2.bf16.xpose.msra.mxu0 0
        %1273 = vmatprep.subr.bf16.mxu0 0
        %1274 = vmatpush2.bf16.xpose.msra.mxu0 0
        %1275 = vmatprep.subr.bf16.mxu0 0
        %1276 = vmatpush2.bf16.xpose.msra.mxu0 0
        %1277 = vmatprep.subr.bf16.mxu0 0
        %1278 = vmatpush2.bf16.xpose.msra.mxu0 0
        %1279 = vmatprep.subr.bf16.mxu0 0
        %1280 = vmatpush2.bf16.xpose.msra.mxu0 0
        %1281 = vmatprep.subr.bf16.mxu0 0
        %1282 = vmatpush2.bf16.xpose.msra.mxu0 0
        %1283 = vmatprep.subr.bf16.mxu0 0
        %1284 = vmatpush2.bf16.xpose.msra.mxu0 0
        %1285 = vmatprep.subr.bf16.mxu0 0
        %1286 = vmatpush2.bf16.xpose.msra.mxu0 0
        %1287 = vmatprep.mubr.bf16.mxu0 0
        %1288 = vmatmul.mubr.bf16.gmra.mxu0 %v718
        %v1289 = vpop.f32.mrf.mxu0
        %v1290 = vadd.f32 0.0, %v1289
        %v1291 = vpop.f32.mrf.mxu0
        %v1292 = vpop.f32.mrf.mxu0
        %v1293 = vpop.f32.mrf.mxu0
        %1294 = vdwg.mxu0
        %v1295 = vsel %vm770, %v1290, -inf
        %1296 = vmax.xlane.f32.xlu0 %v1295
        %v1297 = vpop.xlane.xlu0 %1296
        %v1298 = vsub.f32 %v1290, %v1297
        %v1299 = vmul.f32 %v1298, 1.442695
        %v1300 = vpow.pop %v1299
        %v1301 = vsel %vm770, %v1300, 0.0
        %1302 = vadd.xlane.f32.xlu0 %v1301
        %v1303 = vpop.xlane.xlu0 %1302
        %v1304 = vrcp.pop %v1303
        %v1305 = vmul.f32 %v1300, %v1304
        %v1306 = vpack.c.bf16 %v1305, %v1305
        %v1308 = vsel %vm770, %v1306, 0
        %1310 = vmatprep.subr.bf16.mxu0 0
        %1311 = vmatpush1.bf16.msra.mxu0 0
        %1312 = vmatprep.subr.bf16.mxu0 0
        %1313 = vmatpush1.bf16.msra.mxu0 0
        %1314 = vmatprep.subr.bf16.mxu0 0
        %1315 = vmatpush1.bf16.msra.mxu0 0
        %1316 = vmatprep.subr.bf16.mxu0 0
        %1317 = vmatpush1.bf16.msra.mxu0 0
        %1318 = vmatprep.subr.bf16.mxu0 0
        %1319 = vmatpush1.bf16.msra.mxu0 0
        %1320 = vmatprep.subr.bf16.mxu0 0
        %1321 = vmatpush1.bf16.msra.mxu0 0
        %1322 = vmatprep.subr.bf16.mxu0 0
        %1323 = vmatpush1.bf16.msra.mxu0 0
        %1324 = vmatprep.subr.bf16.mxu0 0
        %1325 = vmatpush1.bf16.msra.mxu0 %v788
        %1326 = vmatprep.subr.bf16.mxu0 0
        %1327 = vmatpush2.bf16.msra.mxu0 0
        %1328 = vmatprep.subr.bf16.mxu0 0
        %1329 = vmatpush2.bf16.msra.mxu0 0
        %1330 = vmatprep.subr.bf16.mxu0 0
        %1331 = vmatpush2.bf16.msra.mxu0 0
        %1332 = vmatprep.subr.bf16.mxu0 0
        %1333 = vmatpush2.bf16.msra.mxu0 0
        %1334 = vmatprep.subr.bf16.mxu0 0
        %1335 = vmatpush2.bf16.msra.mxu0 0
        %1336 = vmatprep.subr.bf16.mxu0 0
        %1337 = vmatpush2.bf16.msra.mxu0 0
        %1338 = vmatprep.subr.bf16.mxu0 0
        %1339 = vmatpush2.bf16.msra.mxu0 0
        %1340 = vmatprep.subr.bf16.mxu0 0
        %1341 = vmatpush2.bf16.msra.mxu0 0
        %1342 = vmatprep.mubr.bf16.mxu0 0
        %1343 = vmatmul.mubr.bf16.gmra.mxu0 %v1308
        %v1344 = vpop.f32.mrf.mxu0
        %v1345 = vadd.f32 0.0, %v1344
        %v1346 = vpop.f32.mrf.mxu0
        %v1347 = vpop.f32.mrf.mxu0
        %v1348 = vpop.f32.mrf.mxu0
        %1349 = vdwg.mxu0
        %v1350 = vsel %vm1252, %v1345, 0.0
        %v1351 = vadd.f32 %v1247, %v1350
        %vm1352 = vcmp.ge.s32.totalorder %v722, 60
        %vm1353 = vcmp.lt.s32.totalorder %v722, 70
        %vm1354 = vmand %vm1352, %vm1353
        %v1355 = vsel %vm1354, 1, 0
        %vm1356 = vcmp.eq.s32.totalorder %v1355, 1
        %vm1357 = vmpackc.low %vm1356, %vm1356
        %v1358 = vsel %vm1357, %v719, 0
        %1359 = vmatprep.subr.bf16.mxu0 0
        %1360 = vmatpush1.bf16.xpose.msra.mxu0 0
        %1361 = vmatprep.subr.bf16.mxu0 0
        %1362 = vmatpush1.bf16.xpose.msra.mxu0 0
        %1363 = vmatprep.subr.bf16.mxu0 0
        %1364 = vmatpush1.bf16.xpose.msra.mxu0 0
        %1365 = vmatprep.subr.bf16.mxu0 0
        %1366 = vmatpush1.bf16.xpose.msra.mxu0 0
        %1367 = vmatprep.subr.bf16.mxu0 0
        %1368 = vmatpush1.bf16.xpose.msra.mxu0 0
        %1369 = vmatprep.subr.bf16.mxu0 0
        %1370 = vmatpush1.bf16.xpose.msra.mxu0 0
        %1371 = vmatprep.subr.bf16.mxu0 0
        %1372 = vmatpush1.bf16.xpose.msra.mxu0 0
        %1373 = vmatprep.subr.bf16.mxu0 0
        %1374 = vmatpush1.bf16.xpose.msra.mxu0 %v1358
        %1375 = vmatprep.subr.bf16.mxu0 0
        %1376 = vmatpush2.bf16.xpose.msra.mxu0 0
        %1377 = vmatprep.subr.bf16.mxu0 0
        %1378 = vmatpush2.bf16.xpose.msra.mxu0 0
        %1379 = vmatprep.subr.bf16.mxu0 0
        %1380 = vmatpush2.bf16.xpose.msra.mxu0 0
        %1381 = vmatprep.subr.bf16.mxu0 0
        %1382 = vmatpush2.bf16.xpose.msra.mxu0 0
        %1383 = vmatprep.subr.bf16.mxu0 0
        %1384 = vmatpush2.bf16.xpose.msra.mxu0 0
        %1385 = vmatprep.subr.bf16.mxu0 0
        %1386 = vmatpush2.bf16.xpose.msra.mxu0 0
        %1387 = vmatprep.subr.bf16.mxu0 0
        %1388 = vmatpush2.bf16.xpose.msra.mxu0 0
        %1389 = vmatprep.subr.bf16.mxu0 0
        %1390 = vmatpush2.bf16.xpose.msra.mxu0 0
        %1391 = vmatprep.mubr.bf16.mxu0 0
        %1392 = vmatmul.mubr.bf16.gmra.mxu0 %v718
        %v1393 = vpop.f32.mrf.mxu0
        %v1394 = vadd.f32 0.0, %v1393
        %v1395 = vpop.f32.mrf.mxu0
        %v1396 = vpop.f32.mrf.mxu0
        %v1397 = vpop.f32.mrf.mxu0
        %1398 = vdwg.mxu0
        %v1399 = vsel %vm770, %v1394, -inf
        %1400 = vmax.xlane.f32.xlu0 %v1399
        %v1401 = vpop.xlane.xlu0 %1400
        %v1402 = vsub.f32 %v1394, %v1401
        %v1403 = vmul.f32 %v1402, 1.442695
        %v1404 = vpow.pop %v1403
        %v1405 = vsel %vm770, %v1404, 0.0
        %1406 = vadd.xlane.f32.xlu0 %v1405
        %v1407 = vpop.xlane.xlu0 %1406
        %v1408 = vrcp.pop %v1407
        %v1409 = vmul.f32 %v1404, %v1408
        %v1410 = vpack.c.bf16 %v1409, %v1409
        %v1412 = vsel %vm770, %v1410, 0
        %1414 = vmatprep.subr.bf16.mxu0 0
        %1415 = vmatpush1.bf16.msra.mxu0 0
        %1416 = vmatprep.subr.bf16.mxu0 0
        %1417 = vmatpush1.bf16.msra.mxu0 0
        %1418 = vmatprep.subr.bf16.mxu0 0
        %1419 = vmatpush1.bf16.msra.mxu0 0
        %1420 = vmatprep.subr.bf16.mxu0 0
        %1421 = vmatpush1.bf16.msra.mxu0 0
        %1422 = vmatprep.subr.bf16.mxu0 0
        %1423 = vmatpush1.bf16.msra.mxu0 0
        %1424 = vmatprep.subr.bf16.mxu0 0
        %1425 = vmatpush1.bf16.msra.mxu0 0
        %1426 = vmatprep.subr.bf16.mxu0 0
        %1427 = vmatpush1.bf16.msra.mxu0 0
        %1428 = vmatprep.subr.bf16.mxu0 0
        %1429 = vmatpush1.bf16.msra.mxu0 %v788
        %1430 = vmatprep.subr.bf16.mxu0 0
        %1431 = vmatpush2.bf16.msra.mxu0 0
        %1432 = vmatprep.subr.bf16.mxu0 0
        %1433 = vmatpush2.bf16.msra.mxu0 0
        %1434 = vmatprep.subr.bf16.mxu0 0
        %1435 = vmatpush2.bf16.msra.mxu0 0
        %1436 = vmatprep.subr.bf16.mxu0 0
        %1437 = vmatpush2.bf16.msra.mxu0 0
        %1438 = vmatprep.subr.bf16.mxu0 0
        %1439 = vmatpush2.bf16.msra.mxu0 0
        %1440 = vmatprep.subr.bf16.mxu0 0
        %1441 = vmatpush2.bf16.msra.mxu0 0
        %1442 = vmatprep.subr.bf16.mxu0 0
        %1443 = vmatpush2.bf16.msra.mxu0 0
        %1444 = vmatprep.subr.bf16.mxu0 0
        %1445 = vmatpush2.bf16.msra.mxu0 0
        %1446 = vmatprep.mubr.bf16.mxu0 0
        %1447 = vmatmul.mubr.bf16.gmra.mxu0 %v1412
        %v1448 = vpop.f32.mrf.mxu0
        %v1449 = vadd.f32 0.0, %v1448
        %v1450 = vpop.f32.mrf.mxu0
        %v1451 = vpop.f32.mrf.mxu0
        %v1452 = vpop.f32.mrf.mxu0
        %1453 = vdwg.mxu0
        %v1454 = vsel %vm1356, %v1449, 0.0
        %v1455 = vadd.f32 %v1351, %v1454
        %vm1456 = vcmp.ge.s32.totalorder %v722, 70
        %vm1457 = vcmp.lt.s32.totalorder %v722, 80
        %vm1458 = vmand %vm1456, %vm1457
        %v1459 = vsel %vm1458, 1, 0
        %vm1460 = vcmp.eq.s32.totalorder %v1459, 1
        %vm1461 = vmpackc.low %vm1460, %vm1460
        %v1462 = vsel %vm1461, %v719, 0
        %1463 = vmatprep.subr.bf16.mxu0 0
        %1464 = vmatpush1.bf16.xpose.msra.mxu0 0
        %1465 = vmatprep.subr.bf16.mxu0 0
        %1466 = vmatpush1.bf16.xpose.msra.mxu0 0
        %1467 = vmatprep.subr.bf16.mxu0 0
        %1468 = vmatpush1.bf16.xpose.msra.mxu0 0
        %1469 = vmatprep.subr.bf16.mxu0 0
        %1470 = vmatpush1.bf16.xpose.msra.mxu0 0
        %1471 = vmatprep.subr.bf16.mxu0 0
        %1472 = vmatpush1.bf16.xpose.msra.mxu0 0
        %1473 = vmatprep.subr.bf16.mxu0 0
        %1474 = vmatpush1.bf16.xpose.msra.mxu0 0
        %1475 = vmatprep.subr.bf16.mxu0 0
        %1476 = vmatpush1.bf16.xpose.msra.mxu0 0
        %1477 = vmatprep.subr.bf16.mxu0 0
        %1478 = vmatpush1.bf16.xpose.msra.mxu0 %v1462
        %1479 = vmatprep.subr.bf16.mxu0 0
        %1480 = vmatpush2.bf16.xpose.msra.mxu0 0
        %1481 = vmatprep.subr.bf16.mxu0 0
        %1482 = vmatpush2.bf16.xpose.msra.mxu0 0
        %1483 = vmatprep.subr.bf16.mxu0 0
        %1484 = vmatpush2.bf16.xpose.msra.mxu0 0
        %1485 = vmatprep.subr.bf16.mxu0 0
        %1486 = vmatpush2.bf16.xpose.msra.mxu0 0
        %1487 = vmatprep.subr.bf16.mxu0 0
        %1488 = vmatpush2.bf16.xpose.msra.mxu0 0
        %1489 = vmatprep.subr.bf16.mxu0 0
        %1490 = vmatpush2.bf16.xpose.msra.mxu0 0
        %1491 = vmatprep.subr.bf16.mxu0 0
        %1492 = vmatpush2.bf16.xpose.msra.mxu0 0
        %1493 = vmatprep.subr.bf16.mxu0 0
        %1494 = vmatpush2.bf16.xpose.msra.mxu0 0
        %1495 = vmatprep.mubr.bf16.mxu0 0
        %1496 = vmatmul.mubr.bf16.gmra.mxu0 %v718
        %v1497 = vpop.f32.mrf.mxu0
        %v1498 = vadd.f32 0.0, %v1497
        %v1499 = vpop.f32.mrf.mxu0
        %v1500 = vpop.f32.mrf.mxu0
        %v1501 = vpop.f32.mrf.mxu0
        %1502 = vdwg.mxu0
        %v1503 = vsel %vm770, %v1498, -inf
        %1504 = vmax.xlane.f32.xlu0 %v1503
        %v1505 = vpop.xlane.xlu0 %1504
        %v1506 = vsub.f32 %v1498, %v1505
        %v1507 = vmul.f32 %v1506, 1.442695
        %v1508 = vpow.pop %v1507
        %v1509 = vsel %vm770, %v1508, 0.0
        %1510 = vadd.xlane.f32.xlu0 %v1509
        %v1511 = vpop.xlane.xlu0 %1510
        %v1512 = vrcp.pop %v1511
        %v1513 = vmul.f32 %v1508, %v1512
        %v1514 = vpack.c.bf16 %v1513, %v1513
        %v1516 = vsel %vm770, %v1514, 0
        %1518 = vmatprep.subr.bf16.mxu0 0
        %1519 = vmatpush1.bf16.msra.mxu0 0
        %1520 = vmatprep.subr.bf16.mxu0 0
        %1521 = vmatpush1.bf16.msra.mxu0 0
        %1522 = vmatprep.subr.bf16.mxu0 0
        %1523 = vmatpush1.bf16.msra.mxu0 0
        %1524 = vmatprep.subr.bf16.mxu0 0
        %1525 = vmatpush1.bf16.msra.mxu0 0
        %1526 = vmatprep.subr.bf16.mxu0 0
        %1527 = vmatpush1.bf16.msra.mxu0 0
        %1528 = vmatprep.subr.bf16.mxu0 0
        %1529 = vmatpush1.bf16.msra.mxu0 0
        %1530 = vmatprep.subr.bf16.mxu0 0
        %1531 = vmatpush1.bf16.msra.mxu0 0
        %1532 = vmatprep.subr.bf16.mxu0 0
        %1533 = vmatpush1.bf16.msra.mxu0 %v788
        %1534 = vmatprep.subr.bf16.mxu0 0
        %1535 = vmatpush2.bf16.msra.mxu0 0
        %1536 = vmatprep.subr.bf16.mxu0 0
        %1537 = vmatpush2.bf16.msra.mxu0 0
        %1538 = vmatprep.subr.bf16.mxu0 0
        %1539 = vmatpush2.bf16.msra.mxu0 0
        %1540 = vmatprep.subr.bf16.mxu0 0
        %1541 = vmatpush2.bf16.msra.mxu0 0
        %1542 = vmatprep.subr.bf16.mxu0 0
        %1543 = vmatpush2.bf16.msra.mxu0 0
        %1544 = vmatprep.subr.bf16.mxu0 0
        %1545 = vmatpush2.bf16.msra.mxu0 0
        %1546 = vmatprep.subr.bf16.mxu0 0
        %1547 = vmatpush2.bf16.msra.mxu0 0
        %1548 = vmatprep.subr.bf16.mxu0 0
        %1549 = vmatpush2.bf16.msra.mxu0 0
        %1550 = vmatprep.mubr.bf16.mxu0 0
        %1551 = vmatmul.mubr.bf16.gmra.mxu0 %v1516
        %v1552 = vpop.f32.mrf.mxu0
        %v1553 = vadd.f32 0.0, %v1552
        %v1554 = vpop.f32.mrf.mxu0
        %v1555 = vpop.f32.mrf.mxu0
        %v1556 = vpop.f32.mrf.mxu0
        %1557 = vdwg.mxu0
        %v1558 = vsel %vm1460, %v1553, 0.0
        %v1559 = vadd.f32 %v1455, %v1558
        %1560 = vst [vmem:[%s174] sm:$0xff] %v1559
        %s1561 = sand.u32 %s75, 1
        %s1562 = scalar_lea.sflag [#allocation4], %s1561
        %s1563 = sand.u32 %s75, 1
        %s1564 = smul.addr %s1563, 8
        %s1565 = scalar_lea.vmem [#allocation7], %s1564
        // Predicated region
        $region37: #{apply.1} parent=27 // pred_check
          %p1566 = pneg %p85
        $region38: #{apply.1} parent=27 // pred_check_branch
          %1568 = sbr.rel (%p1566) target = $region40
        $region39: #{apply.1} parent=27 // pred_region
          %s1570 = ssub.s32 128, 128
          %1571 = vsyncadd %s1562, %s1570
          %s1572 = smul.addr %s20, 128
          %s1573 = scalar_lea.hbm %s2, %s1572
          %s1575 = sshll.u32 %s1565, 4
          %s1576 = int_to_ptr.vmem [resolvable:$true] %s1575
          %1578 = dma.vmem_to_hbm [thread:$0]  %s1576, 128, %s1573, %s1562
        $region40: #{apply.1} parent=27 // pred_fallthru
          _
      $region28: #{apply.1} parent=5 // pred_fallthru
        _
      %p1579 = scmp.le.s32.totalorder 2, %s15
      // Predicated region
      $region41: #{apply.1} parent=5 // pred_check
        %p1580 = pneg %p1579
      $region42: #{apply.1} parent=5 // pred_check_branch
        %1582 = sbr.rel (%p1580) target = $region44
      $region43: #{apply.1} parent=5 // pred_region
        %s1583 = ssub.s32 %s15, 2
        // Predicated region
        $region45: #{apply.1} parent=43 // pred_check
          %p1584 = pneg %p91
        $region46: #{apply.1} parent=43 // pred_check_branch
          %1586 = sbr.rel (%p1584) target = $region48
        $region47: #{apply.1} parent=43 // pred_region
          %s1587 = sand.u32 %s76, 1
          %s1588 = scalar_lea.sflag [#allocation4], %s1587
          %s1589 = sand.u32 %s76, 1
          %s1590 = smul.addr %s1589, 8
          %s1591 = scalar_lea.vmem [#allocation7], %s1590
          %1592 = dma.done %s1588, 128
        $region48: #{apply.1} parent=43 // pred_fallthru
          _
      $region44: #{apply.1} parent=5 // pred_fallthru
        _
    $region6: #{apply.1} parent=1 // loop_footer
      %s19 = sadd.s32 1, %s15
    $region7: #{apply.1} parent=1 // loop_footer_branch
      %14 = sbr.rel target = $region3
    $region8: #{apply.1} parent=1 // loop_exit
      _
    %1593 = vsyncpa [#allocation3], 1
    %s1594 = scalar_lea.sflag [#allocation3], 1
    %1595 = vsyncpa %s1594, 1
    %1596 = vsyncpa [#allocation6], 1
    %1597 = vsyncpa [#allocation4], 1
    %s1598 = scalar_lea.sflag [#allocation4], 1
    %1599 = vsyncpa %s1598, 1

</llo_original>
